<compile_context>
chip_gen: v5e
topology: v5e:2x2
jax: 0.10.0
libtpu: 0.0.40
codegen_flags: <defaults>
</compile_context>

<pallas_src>
import functools

import jax
import jax.numpy as jnp
from jax import lax
from jax.experimental import pallas as pl
from jax.experimental.pallas import tpu as pltpu


def _round_up(x, m):
    return (x + m - 1) // m * m


def lstm_kernel(emb_ref, wih_ref, whh_ref, b_ref, wfc_ref, bfc_ref,
                out_ref, gx_scr, *, seq_len, batch_p, hidden_p):
    """LSTM recurrence over the full sequence + final FC projection.

    emb_ref : (S*Bp, Ep)   embedded tokens, time-major, batch padded to 8
    wih_ref : (Ep, 4*Hp)   input->gates weight (transposed, gate-wise padded)
    whh_ref : (Hp, 4*Hp)   hidden->gates weight (transposed, gate-wise padded)
    b_ref   : (1, 4*Hp)    combined bias (b_ih + b_hh), gate-wise padded
    wfc_ref : (Hp, Op)     fc weight (transposed, padded)
    bfc_ref : (1, Op)      fc bias (padded)
    out_ref : (Bp, Op)     output logits (padded)
    gx_scr  : (S*Bp, 4*Hp) VMEM scratch holding the hoisted input projection
    """
    Hp = hidden_p

    # --- Hoisted, time-invariant input projection for ALL timesteps --------
    # One large MXU matmul (M = S*Bp) instead of S tiny M=B matmuls; bias is
    # broadcast exactly once here.
    gx_scr[...] = (
        jnp.dot(emb_ref[...], wih_ref[...], preferred_element_type=jnp.float32)
        + b_ref[...]
    )

    # --- Recurrence ---------------------------------------------------------
    def step(t, carry):
        h, c = carry                                         # each (Bp, Hp)
        row0 = pl.multiple_of(t * batch_p, batch_p)          # sublane-aligned
        gates = gx_scr[pl.ds(row0, batch_p), :] + jnp.dot(
            h, whh_ref[...], preferred_element_type=jnp.float32)  # (Bp, 4Hp)
        # PyTorch gate ordering: i, f, g, o — each slice is 128-lane aligned.
        i_g = jax.nn.sigmoid(gates[:, 0 * Hp:1 * Hp])
        f_g = jax.nn.sigmoid(gates[:, 1 * Hp:2 * Hp])
        g_g = jnp.tanh(gates[:, 2 * Hp:3 * Hp])
        o_g = jax.nn.sigmoid(gates[:, 3 * Hp:4 * Hp])
        c_new = f_g * c + i_g * g_g
        h_new = o_g * jnp.tanh(c_new)
        return (h_new, c_new)

    zeros = jnp.zeros((batch_p, Hp), jnp.float32)
    h_last, _ = lax.fori_loop(0, seq_len, step, (zeros, zeros), unroll=True)

    # --- Dropout is identity at inference; final linear projection ----------
    out_ref[...] = (
        jnp.dot(h_last, wfc_ref[...], preferred_element_type=jnp.float32)
        + bfc_ref[...]
    )


def lstm_forward(text, emb_table, w_ih, w_hh, b_ih, b_hh, w_fc, b_fc):
    """text: (S, B) int32 token ids.  Returns (B, output_dim) float32 logits."""
    S, B = text.shape
    E = emb_table.shape[1]
    H = w_hh.shape[1]
    O = w_fc.shape[0]

    f32 = jnp.float32
    Bp = _round_up(B, 8)       # sublane alignment
    Ep = _round_up(E, 128)     # lane alignment for the hoisted matmul K dim
    Hp = _round_up(H, 128)     # lane-aligned gate boundaries
    Op = _round_up(O, 128)     # lane-dense output store

    # Glue: embedding gather, then zero-pad batch & embedding dims.
    embedded = jnp.take(emb_table.astype(f32), text, axis=0)        # (S, B, E)
    embedded = jnp.pad(embedded, ((0, 0), (0, Bp - B), (0, Ep - E)))
    emb_flat = embedded.reshape(S * Bp, Ep)                         # (S*Bp, Ep)

    # Gate-blockwise zero-padding: each gate block padded H -> Hp so the four
    # gate slices inside the kernel land on 128-lane boundaries.  Zero padding
    # keeps padded hidden columns exactly 0 through the recurrence.
    def pad_gatewise(w_t, rows_p):                   # w_t: (rows, 4H)
        rows = w_t.shape[0]
        w4 = w_t.reshape(rows, 4, H)
        w4 = jnp.pad(w4, ((0, rows_p - rows), (0, 0), (0, Hp - H)))
        return w4.reshape(rows_p, 4 * Hp)

    wih_p = pad_gatewise(w_ih.T.astype(f32), Ep)                    # (Ep, 4Hp)
    whh_p = pad_gatewise(w_hh.T.astype(f32), Hp)                    # (Hp, 4Hp)
    bias = (b_ih + b_hh).astype(f32).reshape(4, H)
    bias = jnp.pad(bias, ((0, 0), (0, Hp - H))).reshape(1, 4 * Hp)  # (1, 4Hp)

    wfc_p = jnp.pad(w_fc.T.astype(f32), ((0, Hp - H), (0, Op - O))) # (Hp, Op)
    bfc_p = jnp.pad(b_fc.astype(f32), (0, Op - O)).reshape(1, Op)   # (1, Op)

    kernel = functools.partial(
        lstm_kernel, seq_len=S, batch_p=Bp, hidden_p=Hp)

    # VMEM budget: resident inputs/output + hoisted-gates scratch, with 2x
    # headroom (well under the scoped limit on all of v5e/v6e/v7x at these
    # shapes).
    resident_elems = (emb_flat.size + wih_p.size + whh_p.size + bias.size
                      + wfc_p.size + bfc_p.size + Bp * Op + S * Bp * 4 * Hp)
    vmem_bytes = int(min(96 * 1024 * 1024,
                         max(4 * 1024 * 1024, 2 * 4 * resident_elems)))

    out_p = pl.pallas_call(
        kernel,
        out_shape=jax.ShapeDtypeStruct((Bp, Op), f32),
        in_specs=[pl.BlockSpec(memory_space=pltpu.MemorySpace.VMEM)] * 6,
        out_specs=pl.BlockSpec(memory_space=pltpu.MemorySpace.VMEM),
        scratch_shapes=[pltpu.VMEM((S * Bp, 4 * Hp), jnp.float32)],
        compiler_params=pltpu.CompilerParams(vmem_limit_bytes=vmem_bytes),
    )(emb_flat, wih_p, whh_p, bias, wfc_p, bfc_p)

    return out_p[:B, :O]


def lstm_reference(text, emb_table, w_ih, w_hh, b_ih, b_hh, w_fc, b_fc):
    """Pure-JAX reference mirroring torch.nn.LSTM + Linear (eval mode)."""
    S, B = text.shape
    H = w_hh.shape[1]
    x = jnp.take(emb_table, text, axis=0)

    def step(carry, x_t):
        h, c = carry
        gates = x_t @ w_ih.T + h @ w_hh.T + b_ih + b_hh
        i = jax.nn.sigmoid(gates[:, 0:H])
        f = jax.nn.sigmoid(gates[:, H:2 * H])
        g = jnp.tanh(gates[:, 2 * H:3 * H])
        o = jax.nn.sigmoid(gates[:, 3 * H:4 * H])
        c = f * c + i * g
        h = o * jnp.tanh(c)
        return (h, c), None

    init = (jnp.zeros((B, H), jnp.float32), jnp.zeros((B, H), jnp.float32))
    (h, _), _ = lax.scan(step, init, x)
    return h @ w_fc.T + b_fc


if __name__ == "__main__":
    # Small, deterministic configuration.
    vocab_size = 50        # input_dim
    embedding_dim = 32
    hidden_dim = 32
    output_dim = 4
    seq_len = 8
    batch = 2

    key = jax.random.PRNGKey(0)
    k_emb, k_ih, k_hh, k_bih, k_bhh, k_fc, k_bfc, k_txt = jax.random.split(key, 8)

    emb_table = jax.random.normal(k_emb, (vocab_size, embedding_dim), jnp.float32) * 0.1
    w_ih = jax.random.normal(k_ih, (4 * hidden_dim, embedding_dim), jnp.float32) * 0.1
    w_hh = jax.random.normal(k_hh, (4 * hidden_dim, hidden_dim), jnp.float32) * 0.1
    b_ih = jax.random.normal(k_bih, (4 * hidden_dim,), jnp.float32) * 0.1
    b_hh = jax.random.normal(k_bhh, (4 * hidden_dim,), jnp.float32) * 0.1
    w_fc = jax.random.normal(k_fc, (output_dim, hidden_dim), jnp.float32) * 0.1
    b_fc = jax.random.normal(k_bfc, (output_dim,), jnp.float32) * 0.1

    text = jax.random.randint(k_txt, (seq_len, batch), 0, vocab_size, jnp.int32)

    out = lstm_forward(text, emb_table, w_ih, w_hh, b_ih, b_hh, w_fc, b_fc)
    out = jax.block_until_ready(out)

    ref = lstm_reference(text, emb_table, w_ih, w_hh, b_ih, b_hh, w_fc, b_fc)
    assert out.shape == (batch, output_dim)
    assert jnp.allclose(out, ref, atol=1e-5, rtol=1e-5), (out, ref)

    print("KERNEL_OK")
</pallas_src>

<mosaic_0001>
module attributes {stable_mosaic.version = 11 : i64} {
  func.func @lstm_kernel(%arg0: memref<64x128xf32, #tpu.memory_space<vmem>>, %arg1: memref<128x512xf32, #tpu.memory_space<vmem>>, %arg2: memref<128x512xf32, #tpu.memory_space<vmem>>, %arg3: memref<1x512xf32, #tpu.memory_space<vmem>>, %arg4: memref<128x128xf32, #tpu.memory_space<vmem>>, %arg5: memref<1x128xf32, #tpu.memory_space<vmem>>, %arg6: memref<8x128xf32, #tpu.memory_space<vmem>>, %arg7: memref<64x512xf32, #tpu.memory_space<vmem>>) attributes {dimension_semantics = [], scalar_prefetch = 0 : i64, scratch_operands = 1 : i64, tpu.core_type = #tpu.core_type<tc>} {
    %c0 = arith.constant 0 : index
    %c0_0 = arith.constant 0 : index
    %0 = vector.load %arg0[%c0, %c0_0] : memref<64x128xf32, #tpu.memory_space<vmem>>, vector<64x128xf32>
    %c0_1 = arith.constant 0 : index
    %c0_2 = arith.constant 0 : index
    %1 = vector.load %arg1[%c0_1, %c0_2] : memref<128x512xf32, #tpu.memory_space<vmem>>, vector<128x512xf32>
    %cst = arith.constant dense<0.000000e+00> : vector<64x512xf32>
    %2 = tpu.matmul %0, %1, %cst {dimension_numbers = #tpu.dot_dimension_numbers<[1], [0], [0], [1], [0, 0, 1, 1], [], []>} : vector<64x128xf32>, vector<128x512xf32>, vector<64x512xf32> -> vector<64x512xf32>
    %c0_3 = arith.constant 0 : index
    %c0_4 = arith.constant 0 : index
    %3 = vector.load %arg3[%c0_3, %c0_4] : memref<1x512xf32, #tpu.memory_space<vmem>>, vector<1x512xf32>
    %4 = vector.broadcast %3 : vector<1x512xf32> to vector<64x512xf32>
    %5 = arith.addf %2, %4 : vector<64x512xf32>
    %c0_5 = arith.constant 0 : index
    %c0_6 = arith.constant 0 : index
    %6 = vector.load %arg7[%c0_5, %c0_6] : memref<64x512xf32, #tpu.memory_space<vmem>>, vector<64x512xf32>
    tpu.vector_store %arg7[%c0_5, %c0_6], %5 {strides = array<i32>} : memref<64x512xf32, #tpu.memory_space<vmem>>, vector<64x512xf32>,
    %cst_7 = arith.constant 0.000000e+00 : f32
    %7 = vector.broadcast %cst_7 : f32 to vector<8x128xf32>
    %c0_i32 = arith.constant 0 : i32
    %c8_i32 = arith.constant 8 : i32
    %8 = arith.muli %c0_i32, %c8_i32 : i32
    %9 = tpu.assume_multiple %8, 8 : i32
    %10 = arith.index_cast %9 : i32 to index
    %c0_8 = arith.constant 0 : index
    %11 = vector.load %arg7[%10, %c0_8] : memref<64x512xf32, #tpu.memory_space<vmem>>, vector<8x512xf32>
    %c0_9 = arith.constant 0 : index
    %c0_10 = arith.constant 0 : index
    %12 = vector.load %arg2[%c0_9, %c0_10] : memref<128x512xf32, #tpu.memory_space<vmem>>, vector<128x512xf32>
    %cst_11 = arith.constant dense<0.000000e+00> : vector<8x512xf32>
    %13 = tpu.matmul %7, %12, %cst_11 {dimension_numbers = #tpu.dot_dimension_numbers<[1], [0], [0], [1], [0, 0, 1, 1], [], []>} : vector<8x128xf32>, vector<128x512xf32>, vector<8x512xf32> -> vector<8x512xf32>
    %14 = arith.addf %11, %13 : vector<8x512xf32>
    %15 = vector.extract_strided_slice %14 {offsets = [0, 0], sizes = [8, 128], strides = [1, 1]} : vector<8x512xf32> to vector<8x128xf32>
    %16 = arith.negf %15 : vector<8x128xf32>
    %17 = math.exp %16 : vector<8x128xf32>
    %cst_12 = arith.constant 1.000000e+00 : f32
    %18 = vector.broadcast %cst_12 : f32 to vector<8x128xf32>
    %19 = arith.addf %18, %17 : vector<8x128xf32>
    %20 = arith.divf %18, %19 : vector<8x128xf32>
    %21 = vector.extract_strided_slice %14 {offsets = [0, 128], sizes = [8, 128], strides = [1, 1]} : vector<8x512xf32> to vector<8x128xf32>
    %22 = arith.negf %21 : vector<8x128xf32>
    %23 = math.exp %22 : vector<8x128xf32>
    %cst_13 = arith.constant 1.000000e+00 : f32
    %24 = vector.broadcast %cst_13 : f32 to vector<8x128xf32>
    %25 = arith.addf %24, %23 : vector<8x128xf32>
    %26 = arith.divf %24, %25 : vector<8x128xf32>
    %27 = vector.extract_strided_slice %14 {offsets = [0, 256], sizes = [8, 128], strides = [1, 1]} : vector<8x512xf32> to vector<8x128xf32>
    %28 = math.tanh %27 : vector<8x128xf32>
    %29 = vector.extract_strided_slice %14 {offsets = [0, 384], sizes = [8, 128], strides = [1, 1]} : vector<8x512xf32> to vector<8x128xf32>
    %30 = arith.negf %29 : vector<8x128xf32>
    %31 = math.exp %30 : vector<8x128xf32>
    %cst_14 = arith.constant 1.000000e+00 : f32
    %32 = vector.broadcast %cst_14 : f32 to vector<8x128xf32>
    %33 = arith.addf %32, %31 : vector<8x128xf32>
    %34 = arith.divf %32, %33 : vector<8x128xf32>
    %35 = arith.mulf %26, %7 : vector<8x128xf32>
    %36 = arith.mulf %20, %28 : vector<8x128xf32>
    %37 = arith.addf %35, %36 : vector<8x128xf32>
    %38 = math.tanh %37 : vector<8x128xf32>
    %39 = arith.mulf %34, %38 : vector<8x128xf32>
    %c1_i32 = arith.constant 1 : i32
    %c8_i32_15 = arith.constant 8 : i32
    %40 = arith.muli %c1_i32, %c8_i32_15 : i32
    %41 = tpu.assume_multiple %40, 8 : i32
    %42 = arith.index_cast %41 : i32 to index
    %c0_16 = arith.constant 0 : index
    %43 = vector.load %arg7[%42, %c0_16] : memref<64x512xf32, #tpu.memory_space<vmem>>, vector<8x512xf32>
    %c0_17 = arith.constant 0 : index
    %c0_18 = arith.constant 0 : index
    %44 = vector.load %arg2[%c0_17, %c0_18] : memref<128x512xf32, #tpu.memory_space<vmem>>, vector<128x512xf32>
    %cst_19 = arith.constant dense<0.000000e+00> : vector<8x512xf32>
    %45 = tpu.matmul %39, %44, %cst_19 {dimension_numbers = #tpu.dot_dimension_numbers<[1], [0], [0], [1], [0, 0, 1, 1], [], []>} : vector<8x128xf32>, vector<128x512xf32>, vector<8x512xf32> -> vector<8x512xf32>
    %46 = arith.addf %43, %45 : vector<8x512xf32>
    %47 = vector.extract_strided_slice %46 {offsets = [0, 0], sizes = [8, 128], strides = [1, 1]} : vector<8x512xf32> to vector<8x128xf32>
    %48 = arith.negf %47 : vector<8x128xf32>
    %49 = math.exp %48 : vector<8x128xf32>
    %cst_20 = arith.constant 1.000000e+00 : f32
    %50 = vector.broadcast %cst_20 : f32 to vector<8x128xf32>
    %51 = arith.addf %50, %49 : vector<8x128xf32>
    %52 = arith.divf %50, %51 : vector<8x128xf32>
    %53 = vector.extract_strided_slice %46 {offsets = [0, 128], sizes = [8, 128], strides = [1, 1]} : vector<8x512xf32> to vector<8x128xf32>
    %54 = arith.negf %53 : vector<8x128xf32>
    %55 = math.exp %54 : vector<8x128xf32>
    %cst_21 = arith.constant 1.000000e+00 : f32
    %56 = vector.broadcast %cst_21 : f32 to vector<8x128xf32>
    %57 = arith.addf %56, %55 : vector<8x128xf32>
    %58 = arith.divf %56, %57 : vector<8x128xf32>
    %59 = vector.extract_strided_slice %46 {offsets = [0, 256], sizes = [8, 128], strides = [1, 1]} : vector<8x512xf32> to vector<8x128xf32>
    %60 = math.tanh %59 : vector<8x128xf32>
    %61 = vector.extract_strided_slice %46 {offsets = [0, 384], sizes = [8, 128], strides = [1, 1]} : vector<8x512xf32> to vector<8x128xf32>
    %62 = arith.negf %61 : vector<8x128xf32>
    %63 = math.exp %62 : vector<8x128xf32>
    %cst_22 = arith.constant 1.000000e+00 : f32
    %64 = vector.broadcast %cst_22 : f32 to vector<8x128xf32>
    %65 = arith.addf %64, %63 : vector<8x128xf32>
    %66 = arith.divf %64, %65 : vector<8x128xf32>
    %67 = arith.mulf %58, %37 : vector<8x128xf32>
    %68 = arith.mulf %52, %60 : vector<8x128xf32>
    %69 = arith.addf %67, %68 : vector<8x128xf32>
    %70 = math.tanh %69 : vector<8x128xf32>
    %71 = arith.mulf %66, %70 : vector<8x128xf32>
    %c2_i32 = arith.constant 2 : i32
    %c8_i32_23 = arith.constant 8 : i32
    %72 = arith.muli %c2_i32, %c8_i32_23 : i32
    %73 = tpu.assume_multiple %72, 8 : i32
    %74 = arith.index_cast %73 : i32 to index
    %c0_24 = arith.constant 0 : index
    %75 = vector.load %arg7[%74, %c0_24] : memref<64x512xf32, #tpu.memory_space<vmem>>, vector<8x512xf32>
    %c0_25 = arith.constant 0 : index
    %c0_26 = arith.constant 0 : index
    %76 = vector.load %arg2[%c0_25, %c0_26] : memref<128x512xf32, #tpu.memory_space<vmem>>, vector<128x512xf32>
    %cst_27 = arith.constant dense<0.000000e+00> : vector<8x512xf32>
    %77 = tpu.matmul %71, %76, %cst_27 {dimension_numbers = #tpu.dot_dimension_numbers<[1], [0], [0], [1], [0, 0, 1, 1], [], []>} : vector<8x128xf32>, vector<128x512xf32>, vector<8x512xf32> -> vector<8x512xf32>
    %78 = arith.addf %75, %77 : vector<8x512xf32>
    %79 = vector.extract_strided_slice %78 {offsets = [0, 0], sizes = [8, 128], strides = [1, 1]} : vector<8x512xf32> to vector<8x128xf32>
    %80 = arith.negf %79 : vector<8x128xf32>
    %81 = math.exp %80 : vector<8x128xf32>
    %cst_28 = arith.constant 1.000000e+00 : f32
    %82 = vector.broadcast %cst_28 : f32 to vector<8x128xf32>
    %83 = arith.addf %82, %81 : vector<8x128xf32>
    %84 = arith.divf %82, %83 : vector<8x128xf32>
    %85 = vector.extract_strided_slice %78 {offsets = [0, 128], sizes = [8, 128], strides = [1, 1]} : vector<8x512xf32> to vector<8x128xf32>
    %86 = arith.negf %85 : vector<8x128xf32>
    %87 = math.exp %86 : vector<8x128xf32>
    %cst_29 = arith.constant 1.000000e+00 : f32
    %88 = vector.broadcast %cst_29 : f32 to vector<8x128xf32>
    %89 = arith.addf %88, %87 : vector<8x128xf32>
    %90 = arith.divf %88, %89 : vector<8x128xf32>
    %91 = vector.extract_strided_slice %78 {offsets = [0, 256], sizes = [8, 128], strides = [1, 1]} : vector<8x512xf32> to vector<8x128xf32>
    %92 = math.tanh %91 : vector<8x128xf32>
    %93 = vector.extract_strided_slice %78 {offsets = [0, 384], sizes = [8, 128], strides = [1, 1]} : vector<8x512xf32> to vector<8x128xf32>
    %94 = arith.negf %93 : vector<8x128xf32>
    %95 = math.exp %94 : vector<8x128xf32>
    %cst_30 = arith.constant 1.000000e+00 : f32
    %96 = vector.broadcast %cst_30 : f32 to vector<8x128xf32>
    %97 = arith.addf %96, %95 : vector<8x128xf32>
    %98 = arith.divf %96, %97 : vector<8x128xf32>
    %99 = arith.mulf %90, %69 : vector<8x128xf32>
    %100 = arith.mulf %84, %92 : vector<8x128xf32>
    %101 = arith.addf %99, %100 : vector<8x128xf32>
    %102 = math.tanh %101 : vector<8x128xf32>
    %103 = arith.mulf %98, %102 : vector<8x128xf32>
    %c3_i32 = arith.constant 3 : i32
    %c8_i32_31 = arith.constant 8 : i32
    %104 = arith.muli %c3_i32, %c8_i32_31 : i32
    %105 = tpu.assume_multiple %104, 8 : i32
    %106 = arith.index_cast %105 : i32 to index
    %c0_32 = arith.constant 0 : index
    %107 = vector.load %arg7[%106, %c0_32] : memref<64x512xf32, #tpu.memory_space<vmem>>, vector<8x512xf32>
    %c0_33 = arith.constant 0 : index
    %c0_34 = arith.constant 0 : index
    %108 = vector.load %arg2[%c0_33, %c0_34] : memref<128x512xf32, #tpu.memory_space<vmem>>, vector<128x512xf32>
    %cst_35 = arith.constant dense<0.000000e+00> : vector<8x512xf32>
    %109 = tpu.matmul %103, %108, %cst_35 {dimension_numbers = #tpu.dot_dimension_numbers<[1], [0], [0], [1], [0, 0, 1, 1], [], []>} : vector<8x128xf32>, vector<128x512xf32>, vector<8x512xf32> -> vector<8x512xf32>
    %110 = arith.addf %107, %109 : vector<8x512xf32>
    %111 = vector.extract_strided_slice %110 {offsets = [0, 0], sizes = [8, 128], strides = [1, 1]} : vector<8x512xf32> to vector<8x128xf32>
    %112 = arith.negf %111 : vector<8x128xf32>
    %113 = math.exp %112 : vector<8x128xf32>
    %cst_36 = arith.constant 1.000000e+00 : f32
    %114 = vector.broadcast %cst_36 : f32 to vector<8x128xf32>
    %115 = arith.addf %114, %113 : vector<8x128xf32>
    %116 = arith.divf %114, %115 : vector<8x128xf32>
    %117 = vector.extract_strided_slice %110 {offsets = [0, 128], sizes = [8, 128], strides = [1, 1]} : vector<8x512xf32> to vector<8x128xf32>
    %118 = arith.negf %117 : vector<8x128xf32>
    %119 = math.exp %118 : vector<8x128xf32>
    %cst_37 = arith.constant 1.000000e+00 : f32
    %120 = vector.broadcast %cst_37 : f32 to vector<8x128xf32>
    %121 = arith.addf %120, %119 : vector<8x128xf32>
    %122 = arith.divf %120, %121 : vector<8x128xf32>
    %123 = vector.extract_strided_slice %110 {offsets = [0, 256], sizes = [8, 128], strides = [1, 1]} : vector<8x512xf32> to vector<8x128xf32>
    %124 = math.tanh %123 : vector<8x128xf32>
    %125 = vector.extract_strided_slice %110 {offsets = [0, 384], sizes = [8, 128], strides = [1, 1]} : vector<8x512xf32> to vector<8x128xf32>
    %126 = arith.negf %125 : vector<8x128xf32>
    %127 = math.exp %126 : vector<8x128xf32>
    %cst_38 = arith.constant 1.000000e+00 : f32
    %128 = vector.broadcast %cst_38 : f32 to vector<8x128xf32>
    %129 = arith.addf %128, %127 : vector<8x128xf32>
    %130 = arith.divf %128, %129 : vector<8x128xf32>
    %131 = arith.mulf %122, %101 : vector<8x128xf32>
    %132 = arith.mulf %116, %124 : vector<8x128xf32>
    %133 = arith.addf %131, %132 : vector<8x128xf32>
    %134 = math.tanh %133 : vector<8x128xf32>
    %135 = arith.mulf %130, %134 : vector<8x128xf32>
    %c4_i32 = arith.constant 4 : i32
    %c8_i32_39 = arith.constant 8 : i32
    %136 = arith.muli %c4_i32, %c8_i32_39 : i32
    %137 = tpu.assume_multiple %136, 8 : i32
    %138 = arith.index_cast %137 : i32 to index
    %c0_40 = arith.constant 0 : index
    %139 = vector.load %arg7[%138, %c0_40] : memref<64x512xf32, #tpu.memory_space<vmem>>, vector<8x512xf32>
    %c0_41 = arith.constant 0 : index
    %c0_42 = arith.constant 0 : index
    %140 = vector.load %arg2[%c0_41, %c0_42] : memref<128x512xf32, #tpu.memory_space<vmem>>, vector<128x512xf32>
    %cst_43 = arith.constant dense<0.000000e+00> : vector<8x512xf32>
    %141 = tpu.matmul %135, %140, %cst_43 {dimension_numbers = #tpu.dot_dimension_numbers<[1], [0], [0], [1], [0, 0, 1, 1], [], []>} : vector<8x128xf32>, vector<128x512xf32>, vector<8x512xf32> -> vector<8x512xf32>
    %142 = arith.addf %139, %141 : vector<8x512xf32>
    %143 = vector.extract_strided_slice %142 {offsets = [0, 0], sizes = [8, 128], strides = [1, 1]} : vector<8x512xf32> to vector<8x128xf32>
    %144 = arith.negf %143 : vector<8x128xf32>
    %145 = math.exp %144 : vector<8x128xf32>
    %cst_44 = arith.constant 1.000000e+00 : f32
    %146 = vector.broadcast %cst_44 : f32 to vector<8x128xf32>
    %147 = arith.addf %146, %145 : vector<8x128xf32>
    %148 = arith.divf %146, %147 : vector<8x128xf32>
    %149 = vector.extract_strided_slice %142 {offsets = [0, 128], sizes = [8, 128], strides = [1, 1]} : vector<8x512xf32> to vector<8x128xf32>
    %150 = arith.negf %149 : vector<8x128xf32>
    %151 = math.exp %150 : vector<8x128xf32>
    %cst_45 = arith.constant 1.000000e+00 : f32
    %152 = vector.broadcast %cst_45 : f32 to vector<8x128xf32>
    %153 = arith.addf %152, %151 : vector<8x128xf32>
    %154 = arith.divf %152, %153 : vector<8x128xf32>
    %155 = vector.extract_strided_slice %142 {offsets = [0, 256], sizes = [8, 128], strides = [1, 1]} : vector<8x512xf32> to vector<8x128xf32>
    %156 = math.tanh %155 : vector<8x128xf32>
    %157 = vector.extract_strided_slice %142 {offsets = [0, 384], sizes = [8, 128], strides = [1, 1]} : vector<8x512xf32> to vector<8x128xf32>
    %158 = arith.negf %157 : vector<8x128xf32>
    %159 = math.exp %158 : vector<8x128xf32>
    %cst_46 = arith.constant 1.000000e+00 : f32
    %160 = vector.broadcast %cst_46 : f32 to vector<8x128xf32>
    %161 = arith.addf %160, %159 : vector<8x128xf32>
    %162 = arith.divf %160, %161 : vector<8x128xf32>
    %163 = arith.mulf %154, %133 : vector<8x128xf32>
    %164 = arith.mulf %148, %156 : vector<8x128xf32>
    %165 = arith.addf %163, %164 : vector<8x128xf32>
    %166 = math.tanh %165 : vector<8x128xf32>
    %167 = arith.mulf %162, %166 : vector<8x128xf32>
    %c5_i32 = arith.constant 5 : i32
    %c8_i32_47 = arith.constant 8 : i32
    %168 = arith.muli %c5_i32, %c8_i32_47 : i32
    %169 = tpu.assume_multiple %168, 8 : i32
    %170 = arith.index_cast %169 : i32 to index
    %c0_48 = arith.constant 0 : index
    %171 = vector.load %arg7[%170, %c0_48] : memref<64x512xf32, #tpu.memory_space<vmem>>, vector<8x512xf32>
    %c0_49 = arith.constant 0 : index
    %c0_50 = arith.constant 0 : index
    %172 = vector.load %arg2[%c0_49, %c0_50] : memref<128x512xf32, #tpu.memory_space<vmem>>, vector<128x512xf32>
    %cst_51 = arith.constant dense<0.000000e+00> : vector<8x512xf32>
    %173 = tpu.matmul %167, %172, %cst_51 {dimension_numbers = #tpu.dot_dimension_numbers<[1], [0], [0], [1], [0, 0, 1, 1], [], []>} : vector<8x128xf32>, vector<128x512xf32>, vector<8x512xf32> -> vector<8x512xf32>
    %174 = arith.addf %171, %173 : vector<8x512xf32>
    %175 = vector.extract_strided_slice %174 {offsets = [0, 0], sizes = [8, 128], strides = [1, 1]} : vector<8x512xf32> to vector<8x128xf32>
    %176 = arith.negf %175 : vector<8x128xf32>
    %177 = math.exp %176 : vector<8x128xf32>
    %cst_52 = arith.constant 1.000000e+00 : f32
    %178 = vector.broadcast %cst_52 : f32 to vector<8x128xf32>
    %179 = arith.addf %178, %177 : vector<8x128xf32>
    %180 = arith.divf %178, %179 : vector<8x128xf32>
    %181 = vector.extract_strided_slice %174 {offsets = [0, 128], sizes = [8, 128], strides = [1, 1]} : vector<8x512xf32> to vector<8x128xf32>
    %182 = arith.negf %181 : vector<8x128xf32>
    %183 = math.exp %182 : vector<8x128xf32>
    %cst_53 = arith.constant 1.000000e+00 : f32
    %184 = vector.broadcast %cst_53 : f32 to vector<8x128xf32>
    %185 = arith.addf %184, %183 : vector<8x128xf32>
    %186 = arith.divf %184, %185 : vector<8x128xf32>
    %187 = vector.extract_strided_slice %174 {offsets = [0, 256], sizes = [8, 128], strides = [1, 1]} : vector<8x512xf32> to vector<8x128xf32>
    %188 = math.tanh %187 : vector<8x128xf32>
    %189 = vector.extract_strided_slice %174 {offsets = [0, 384], sizes = [8, 128], strides = [1, 1]} : vector<8x512xf32> to vector<8x128xf32>
    %190 = arith.negf %189 : vector<8x128xf32>
    %191 = math.exp %190 : vector<8x128xf32>
    %cst_54 = arith.constant 1.000000e+00 : f32
    %192 = vector.broadcast %cst_54 : f32 to vector<8x128xf32>
    %193 = arith.addf %192, %191 : vector<8x128xf32>
    %194 = arith.divf %192, %193 : vector<8x128xf32>
    %195 = arith.mulf %186, %165 : vector<8x128xf32>
    %196 = arith.mulf %180, %188 : vector<8x128xf32>
    %197 = arith.addf %195, %196 : vector<8x128xf32>
    %198 = math.tanh %197 : vector<8x128xf32>
    %199 = arith.mulf %194, %198 : vector<8x128xf32>
    %c6_i32 = arith.constant 6 : i32
    %c8_i32_55 = arith.constant 8 : i32
    %200 = arith.muli %c6_i32, %c8_i32_55 : i32
    %201 = tpu.assume_multiple %200, 8 : i32
    %202 = arith.index_cast %201 : i32 to index
    %c0_56 = arith.constant 0 : index
    %203 = vector.load %arg7[%202, %c0_56] : memref<64x512xf32, #tpu.memory_space<vmem>>, vector<8x512xf32>
    %c0_57 = arith.constant 0 : index
    %c0_58 = arith.constant 0 : index
    %204 = vector.load %arg2[%c0_57, %c0_58] : memref<128x512xf32, #tpu.memory_space<vmem>>, vector<128x512xf32>
    %cst_59 = arith.constant dense<0.000000e+00> : vector<8x512xf32>
    %205 = tpu.matmul %199, %204, %cst_59 {dimension_numbers = #tpu.dot_dimension_numbers<[1], [0], [0], [1], [0, 0, 1, 1], [], []>} : vector<8x128xf32>, vector<128x512xf32>, vector<8x512xf32> -> vector<8x512xf32>
    %206 = arith.addf %203, %205 : vector<8x512xf32>
    %207 = vector.extract_strided_slice %206 {offsets = [0, 0], sizes = [8, 128], strides = [1, 1]} : vector<8x512xf32> to vector<8x128xf32>
    %208 = arith.negf %207 : vector<8x128xf32>
    %209 = math.exp %208 : vector<8x128xf32>
    %cst_60 = arith.constant 1.000000e+00 : f32
    %210 = vector.broadcast %cst_60 : f32 to vector<8x128xf32>
    %211 = arith.addf %210, %209 : vector<8x128xf32>
    %212 = arith.divf %210, %211 : vector<8x128xf32>
    %213 = vector.extract_strided_slice %206 {offsets = [0, 128], sizes = [8, 128], strides = [1, 1]} : vector<8x512xf32> to vector<8x128xf32>
    %214 = arith.negf %213 : vector<8x128xf32>
    %215 = math.exp %214 : vector<8x128xf32>
    %cst_61 = arith.constant 1.000000e+00 : f32
    %216 = vector.broadcast %cst_61 : f32 to vector<8x128xf32>
    %217 = arith.addf %216, %215 : vector<8x128xf32>
    %218 = arith.divf %216, %217 : vector<8x128xf32>
    %219 = vector.extract_strided_slice %206 {offsets = [0, 256], sizes = [8, 128], strides = [1, 1]} : vector<8x512xf32> to vector<8x128xf32>
    %220 = math.tanh %219 : vector<8x128xf32>
    %221 = vector.extract_strided_slice %206 {offsets = [0, 384], sizes = [8, 128], strides = [1, 1]} : vector<8x512xf32> to vector<8x128xf32>
    %222 = arith.negf %221 : vector<8x128xf32>
    %223 = math.exp %222 : vector<8x128xf32>
    %cst_62 = arith.constant 1.000000e+00 : f32
    %224 = vector.broadcast %cst_62 : f32 to vector<8x128xf32>
    %225 = arith.addf %224, %223 : vector<8x128xf32>
    %226 = arith.divf %224, %225 : vector<8x128xf32>
    %227 = arith.mulf %218, %197 : vector<8x128xf32>
    %228 = arith.mulf %212, %220 : vector<8x128xf32>
    %229 = arith.addf %227, %228 : vector<8x128xf32>
    %230 = math.tanh %229 : vector<8x128xf32>
    %231 = arith.mulf %226, %230 : vector<8x128xf32>
    %c7_i32 = arith.constant 7 : i32
    %c8_i32_63 = arith.constant 8 : i32
    %232 = arith.muli %c7_i32, %c8_i32_63 : i32
    %233 = tpu.assume_multiple %232, 8 : i32
    %234 = arith.index_cast %233 : i32 to index
    %c0_64 = arith.constant 0 : index
    %235 = vector.load %arg7[%234, %c0_64] : memref<64x512xf32, #tpu.memory_space<vmem>>, vector<8x512xf32>
    %c0_65 = arith.constant 0 : index
    %c0_66 = arith.constant 0 : index
    %236 = vector.load %arg2[%c0_65, %c0_66] : memref<128x512xf32, #tpu.memory_space<vmem>>, vector<128x512xf32>
    %cst_67 = arith.constant dense<0.000000e+00> : vector<8x512xf32>
    %237 = tpu.matmul %231, %236, %cst_67 {dimension_numbers = #tpu.dot_dimension_numbers<[1], [0], [0], [1], [0, 0, 1, 1], [], []>} : vector<8x128xf32>, vector<128x512xf32>, vector<8x512xf32> -> vector<8x512xf32>
    %238 = arith.addf %235, %237 : vector<8x512xf32>
    %239 = vector.extract_strided_slice %238 {offsets = [0, 0], sizes = [8, 128], strides = [1, 1]} : vector<8x512xf32> to vector<8x128xf32>
    %240 = arith.negf %239 : vector<8x128xf32>
    %241 = math.exp %240 : vector<8x128xf32>
    %cst_68 = arith.constant 1.000000e+00 : f32
    %242 = vector.broadcast %cst_68 : f32 to vector<8x128xf32>
    %243 = arith.addf %242, %241 : vector<8x128xf32>
    %244 = arith.divf %242, %243 : vector<8x128xf32>
    %245 = vector.extract_strided_slice %238 {offsets = [0, 128], sizes = [8, 128], strides = [1, 1]} : vector<8x512xf32> to vector<8x128xf32>
    %246 = arith.negf %245 : vector<8x128xf32>
    %247 = math.exp %246 : vector<8x128xf32>
    %cst_69 = arith.constant 1.000000e+00 : f32
    %248 = vector.broadcast %cst_69 : f32 to vector<8x128xf32>
    %249 = arith.addf %248, %247 : vector<8x128xf32>
    %250 = arith.divf %248, %249 : vector<8x128xf32>
    %251 = vector.extract_strided_slice %238 {offsets = [0, 256], sizes = [8, 128], strides = [1, 1]} : vector<8x512xf32> to vector<8x128xf32>
    %252 = math.tanh %251 : vector<8x128xf32>
    %253 = vector.extract_strided_slice %238 {offsets = [0, 384], sizes = [8, 128], strides = [1, 1]} : vector<8x512xf32> to vector<8x128xf32>
    %254 = arith.negf %253 : vector<8x128xf32>
    %255 = math.exp %254 : vector<8x128xf32>
    %cst_70 = arith.constant 1.000000e+00 : f32
    %256 = vector.broadcast %cst_70 : f32 to vector<8x128xf32>
    %257 = arith.addf %256, %255 : vector<8x128xf32>
    %258 = arith.divf %256, %257 : vector<8x128xf32>
    %259 = arith.mulf %250, %229 : vector<8x128xf32>
    %260 = arith.mulf %244, %252 : vector<8x128xf32>
    %261 = arith.addf %259, %260 : vector<8x128xf32>
    %262 = math.tanh %261 : vector<8x128xf32>
    %263 = arith.mulf %258, %262 : vector<8x128xf32>
    %c8_i32_71 = arith.constant 8 : i32
    %c0_72 = arith.constant 0 : index
    %c0_73 = arith.constant 0 : index
    %264 = vector.load %arg4[%c0_72, %c0_73] : memref<128x128xf32, #tpu.memory_space<vmem>>, vector<128x128xf32>
    %cst_74 = arith.constant dense<0.000000e+00> : vector<8x128xf32>
    %265 = tpu.matmul %263, %264, %cst_74 {dimension_numbers = #tpu.dot_dimension_numbers<[1], [0], [0], [1], [0, 0, 1, 1], [], []>} : vector<8x128xf32>, vector<128x128xf32>, vector<8x128xf32> -> vector<8x128xf32>
    %c0_75 = arith.constant 0 : index
    %c0_76 = arith.constant 0 : index
    %266 = vector.load %arg5[%c0_75, %c0_76] : memref<1x128xf32, #tpu.memory_space<vmem>>, vector<1x128xf32>
    %267 = vector.broadcast %266 : vector<1x128xf32> to vector<8x128xf32>
    %268 = arith.addf %265, %267 : vector<8x128xf32>
    %c0_77 = arith.constant 0 : index
    %c0_78 = arith.constant 0 : index
    %269 = vector.load %arg6[%c0_77, %c0_78] : memref<8x128xf32, #tpu.memory_space<vmem>>, vector<8x128xf32>
    tpu.vector_store %arg6[%c0_77, %c0_78], %268 {strides = array<i32>} : memref<8x128xf32, #tpu.memory_space<vmem>>, vector<8x128xf32>,
    return
  }
}

</mosaic_0001>

<llo_original>
// kernel: tpu_custom_call.1
$region0: #{tpu_custom_call.1}
  #allocation0 [shape = 'u32[]', space=smem, size = 0x4, offset = 0x4, fixed_abs, tag = 'smem constant byte address 0x4 - core index']
  #allocation1 [shape = 'u32[72,128]{1,0:T(1,128)}', space=vmem, size = 0x9000, scoped, tag = 'internal scratch']
  #allocation2 [shape = 'f32[64,512]{1,0:T(8,128)}', space=vmem, size = 0x20000, scoped, tag = 'scratch operand']
  %s0 = inlined_call_operand.hbm [shape: f32[64,128], index: 0, kind: input, shape index: {}]
  %s1 = inlined_call_operand.hbm [shape: f32[128,512], index: 1, kind: input, shape index: {}]
  %s2 = inlined_call_operand.hbm [shape: f32[128,512], index: 2, kind: input, shape index: {}]
  %s3 = inlined_call_operand.hbm [shape: f32[1,512], index: 3, kind: input, shape index: {}]
  %s4 = inlined_call_operand.hbm [shape: f32[128,128], index: 4, kind: input, shape index: {}]
  %s5 = inlined_call_operand.vmem [shape: f32[1,128], index: 5, kind: input, shape index: {}]
  %s6 = inlined_call_operand.hbm [shape: f32[8,128], index: 6, kind: output, shape index: {}]
  %s7 = sld [smem:[#allocation0]]
  $region54: #{tpu_custom_call.1} parent=0
    _
  %s9 = ssub.s32 1, %s7
  %s10 = scalar_select 0, %s9, %s7
  $region1: #{tpu_custom_call.1} parent=0
    #allocation3 [shape = 'u8[32768]{0}', space=vmem, size = 0x8000, scoped, tag = 'input window, operand 0, single buffered']
    #allocation4 [shape = 's32[1]{0}', space=sflag, size = 0x4, scoped, tag = 'scoped memory for tpu_custom_call.1']
    #allocation5 [shape = 's32[1]{0}', space=sflag, size = 0x4, scoped, tag = 'scoped memory for tpu_custom_call.1']
    #allocation6 [shape = 'u8[262144]{0}', space=vmem, size = 0x40000, scoped, tag = 'input window, operand 1, single buffered']
    #allocation7 [shape = 's32[1]{0}', space=sflag, size = 0x4, scoped, tag = 'scoped memory for tpu_custom_call.1']
    #allocation8 [shape = 'u8[262144]{0}', space=vmem, size = 0x40000, scoped, tag = 'input window, operand 2, single buffered']
    #allocation9 [shape = 'u8[2048]{0}', space=vmem, size = 0x800, scoped, tag = 'input window, operand 3, single buffered']
    #allocation10 [shape = 's32[1]{0}', space=sflag, size = 0x4, scoped, tag = 'scoped memory for tpu_custom_call.1']
    #allocation11 [shape = 'u8[65536]{0}', space=vmem, size = 0x10000, scoped, tag = 'input window, operand 4, single buffered']
    #allocation12 [shape = 'u8[4096]{0}', space=vmem, size = 0x1000, scoped, tag = 'output window, operand 0, single buffered']
    %11 = vsyncpa [#allocation4], 0
    %12 = vsyncpa [#allocation7], 0
    %13 = vsyncpa [#allocation10], 0
    %14 = vsyncpa [#allocation5], 0
    // Predicated region
    $region2: #{tpu_custom_call.1} parent=1 // pred_check
      _
    $region3: #{tpu_custom_call.1} parent=1 // pred_check_branch
      %16 = sbr.rel (0) target = $region5
    $region4: #{tpu_custom_call.1} parent=1 // pred_region
      %18 = vsyncadd [#allocation4], 0
      %s19 = sshll.u32 %s0, 4
      %s20 = int_to_ptr.hbm [resolvable:$true] %s19
      %s21 = sshll.u32 [#allocation3], 4
      %s22 = int_to_ptr.vmem [resolvable:$true] %s21
      %27 = dma.hbm_to_vmem [thread:$0]  %s20, 1024, %s22, [#allocation4], 128, 128, 8
    $region5: #{tpu_custom_call.1} parent=1 // pred_fallthru
      _
    // Predicated region
    $region6: #{tpu_custom_call.1} parent=1 // pred_check
      _
    $region7: #{tpu_custom_call.1} parent=1 // pred_check_branch
      %29 = sbr.rel (0) target = $region9
    $region8: #{tpu_custom_call.1} parent=1 // pred_region
      %31 = vsyncadd [#allocation7], 0
      %s32 = sshll.u32 %s1, 4
      %s33 = int_to_ptr.hbm [resolvable:$true] %s32
      %s34 = sshll.u32 [#allocation6], 4
      %s35 = int_to_ptr.vmem [resolvable:$true] %s34
      %40 = dma.hbm_to_vmem [thread:$0]  %s33, 8192, %s35, [#allocation7], 512, 512, 32
    $region9: #{tpu_custom_call.1} parent=1 // pred_fallthru
      _
    // Predicated region
    $region10: #{tpu_custom_call.1} parent=1 // pred_check
      _
    $region11: #{tpu_custom_call.1} parent=1 // pred_check_branch
      %42 = sbr.rel (0) target = $region13
    $region12: #{tpu_custom_call.1} parent=1 // pred_region
      %44 = vsyncadd [#allocation7], 0
      %s45 = sshll.u32 %s2, 4
      %s46 = int_to_ptr.hbm [resolvable:$true] %s45
      %s47 = sshll.u32 [#allocation8], 4
      %s48 = int_to_ptr.vmem [resolvable:$true] %s47
      %53 = dma.hbm_to_vmem [thread:$0]  %s46, 8192, %s48, [#allocation7], 512, 512, 32
    $region13: #{tpu_custom_call.1} parent=1 // pred_fallthru
      _
    // Predicated region
    $region14: #{tpu_custom_call.1} parent=1 // pred_check
      _
    $region15: #{tpu_custom_call.1} parent=1 // pred_check_branch
      %55 = sbr.rel (0) target = $region17
    $region16: #{tpu_custom_call.1} parent=1 // pred_region
      %57 = vsyncadd [#allocation10], 0
      %s59 = sshll.u32 %s3, 4
      %s60 = int_to_ptr.hbm [resolvable:$true] %s59
      %s61 = sshll.u32 [#allocation9], 4
      %s62 = int_to_ptr.vmem [resolvable:$true] %s61
      %64 = dma.hbm_to_vmem [thread:$0]  %s60, 64, %s62, [#allocation10]
    $region17: #{tpu_custom_call.1} parent=1 // pred_fallthru
      _
    // Predicated region
    $region18: #{tpu_custom_call.1} parent=1 // pred_check
      _
    $region19: #{tpu_custom_call.1} parent=1 // pred_check_branch
      %66 = sbr.rel (0) target = $region21
    $region20: #{tpu_custom_call.1} parent=1 // pred_region
      %68 = vsyncadd [#allocation10], 0
      %s69 = sshll.u32 %s4, 4
      %s70 = int_to_ptr.hbm [resolvable:$true] %s69
      %s71 = sshll.u32 [#allocation11], 4
      %s72 = int_to_ptr.vmem [resolvable:$true] %s71
      %77 = dma.hbm_to_vmem [thread:$0]  %s70, 2048, %s72, [#allocation10], 128, 128, 8
    $region21: #{tpu_custom_call.1} parent=1 // pred_fallthru
      _
    // Predicated region
    $region22: #{tpu_custom_call.1} parent=1 // pred_check
      _
    $region23: #{tpu_custom_call.1} parent=1 // pred_check_branch
      %79 = sbr.rel (0) target = $region25
    $region24: #{tpu_custom_call.1} parent=1 // pred_region
      _
    $region25: #{tpu_custom_call.1} parent=1 // pred_fallthru
      _
    // Predicated region
    $region26: #{tpu_custom_call.1} parent=1 // pred_check
      _
    $region27: #{tpu_custom_call.1} parent=1 // pred_check_branch
      %81 = sbr.rel (0) target = $region29
    $region28: #{tpu_custom_call.1} parent=1 // pred_region
      %83 = dma.done [#allocation4], 1024
    $region29: #{tpu_custom_call.1} parent=1 // pred_fallthru
      _
    // Predicated region
    $region30: #{tpu_custom_call.1} parent=1 // pred_check
      _
    $region31: #{tpu_custom_call.1} parent=1 // pred_check_branch
      %85 = sbr.rel (0) target = $region33
    $region32: #{tpu_custom_call.1} parent=1 // pred_region
      %87 = dma.done [#allocation7], 8192
    $region33: #{tpu_custom_call.1} parent=1 // pred_fallthru
      _
    // Predicated region
    $region34: #{tpu_custom_call.1} parent=1 // pred_check
      _
    $region35: #{tpu_custom_call.1} parent=1 // pred_check_branch
      %89 = sbr.rel (0) target = $region37
    $region36: #{tpu_custom_call.1} parent=1 // pred_region
      %91 = dma.done [#allocation7], 8192
    $region37: #{tpu_custom_call.1} parent=1 // pred_fallthru
      _
    // Predicated region
    $region38: #{tpu_custom_call.1} parent=1 // pred_check
      _
    $region39: #{tpu_custom_call.1} parent=1 // pred_check_branch
      %93 = sbr.rel (0) target = $region41
    $region40: #{tpu_custom_call.1} parent=1 // pred_region
      %95 = dma.done [#allocation10], 64
    $region41: #{tpu_custom_call.1} parent=1 // pred_fallthru
      _
    // Predicated region
    $region42: #{tpu_custom_call.1} parent=1 // pred_check
      _
    $region43: #{tpu_custom_call.1} parent=1 // pred_check_branch
      %97 = sbr.rel (0) target = $region45
    $region44: #{tpu_custom_call.1} parent=1 // pred_region
      %99 = dma.done [#allocation10], 2048
    $region45: #{tpu_custom_call.1} parent=1 // pred_fallthru
      _
    %v100 = vld [vmem:[#allocation3] sm:$0xff]
    %v101 = vld [vmem:[#allocation3 + $0x8] sm:$0xff]
    %v102 = vld [vmem:[#allocation3 + $0x10] sm:$0xff]
    %v103 = vld [vmem:[#allocation3 + $0x18] sm:$0xff]
    %v104 = vld [vmem:[#allocation3 + $0x20] sm:$0xff]
    %v105 = vld [vmem:[#allocation3 + $0x28] sm:$0xff]
    %v106 = vld [vmem:[#allocation3 + $0x30] sm:$0xff]
    %v107 = vld [vmem:[#allocation3 + $0x38] sm:$0xff]
    %v108 = vld [vmem:[#allocation6] sm:$0xff]
    %v109 = vld [vmem:[#allocation6 + $0x8] sm:$0xff]
    %v110 = vld [vmem:[#allocation6 + $0x10] sm:$0xff]
    %v111 = vld [vmem:[#allocation6 + $0x18] sm:$0xff]
    %v112 = vld [vmem:[#allocation6 + $0x20] sm:$0xff]
    %v113 = vld [vmem:[#allocation6 + $0x28] sm:$0xff]
    %v114 = vld [vmem:[#allocation6 + $0x30] sm:$0xff]
    %v115 = vld [vmem:[#allocation6 + $0x38] sm:$0xff]
    %v116 = vld [vmem:[#allocation6 + $0x40] sm:$0xff]
    %v117 = vld [vmem:[#allocation6 + $0x48] sm:$0xff]
    %v118 = vld [vmem:[#allocation6 + $0x50] sm:$0xff]
    %v119 = vld [vmem:[#allocation6 + $0x58] sm:$0xff]
    %v120 = vld [vmem:[#allocation6 + $0x60] sm:$0xff]
    %v121 = vld [vmem:[#allocation6 + $0x68] sm:$0xff]
    %v122 = vld [vmem:[#allocation6 + $0x70] sm:$0xff]
    %v123 = vld [vmem:[#allocation6 + $0x78] sm:$0xff]
    %v124 = vld [vmem:[#allocation6 + $0x80] sm:$0xff]
    %v125 = vld [vmem:[#allocation6 + $0x88] sm:$0xff]
    %v126 = vld [vmem:[#allocation6 + $0x90] sm:$0xff]
    %v127 = vld [vmem:[#allocation6 + $0x98] sm:$0xff]
    %v128 = vld [vmem:[#allocation6 + $0xa0] sm:$0xff]
    %v129 = vld [vmem:[#allocation6 + $0xa8] sm:$0xff]
    %v130 = vld [vmem:[#allocation6 + $0xb0] sm:$0xff]
    %v131 = vld [vmem:[#allocation6 + $0xb8] sm:$0xff]
    %v132 = vld [vmem:[#allocation6 + $0xc0] sm:$0xff]
    %v133 = vld [vmem:[#allocation6 + $0xc8] sm:$0xff]
    %v134 = vld [vmem:[#allocation6 + $0xd0] sm:$0xff]
    %v135 = vld [vmem:[#allocation6 + $0xd8] sm:$0xff]
    %v136 = vld [vmem:[#allocation6 + $0xe0] sm:$0xff]
    %v137 = vld [vmem:[#allocation6 + $0xe8] sm:$0xff]
    %v138 = vld [vmem:[#allocation6 + $0xf0] sm:$0xff]
    %v139 = vld [vmem:[#allocation6 + $0xf8] sm:$0xff]
    %v140 = vld [vmem:[#allocation6 + $0x100] sm:$0xff]
    %v141 = vld [vmem:[#allocation6 + $0x108] sm:$0xff]
    %v142 = vld [vmem:[#allocation6 + $0x110] sm:$0xff]
    %v143 = vld [vmem:[#allocation6 + $0x118] sm:$0xff]
    %v144 = vld [vmem:[#allocation6 + $0x120] sm:$0xff]
    %v145 = vld [vmem:[#allocation6 + $0x128] sm:$0xff]
    %v146 = vld [vmem:[#allocation6 + $0x130] sm:$0xff]
    %v147 = vld [vmem:[#allocation6 + $0x138] sm:$0xff]
    %v148 = vld [vmem:[#allocation6 + $0x140] sm:$0xff]
    %v149 = vld [vmem:[#allocation6 + $0x148] sm:$0xff]
    %v150 = vld [vmem:[#allocation6 + $0x150] sm:$0xff]
    %v151 = vld [vmem:[#allocation6 + $0x158] sm:$0xff]
    %v152 = vld [vmem:[#allocation6 + $0x160] sm:$0xff]
    %v153 = vld [vmem:[#allocation6 + $0x168] sm:$0xff]
    %v154 = vld [vmem:[#allocation6 + $0x170] sm:$0xff]
    %v155 = vld [vmem:[#allocation6 + $0x178] sm:$0xff]
    %v156 = vld [vmem:[#allocation6 + $0x180] sm:$0xff]
    %v157 = vld [vmem:[#allocation6 + $0x188] sm:$0xff]
    %v158 = vld [vmem:[#allocation6 + $0x190] sm:$0xff]
    %v159 = vld [vmem:[#allocation6 + $0x198] sm:$0xff]
    %v160 = vld [vmem:[#allocation6 + $0x1a0] sm:$0xff]
    %v161 = vld [vmem:[#allocation6 + $0x1a8] sm:$0xff]
    %v162 = vld [vmem:[#allocation6 + $0x1b0] sm:$0xff]
    %v163 = vld [vmem:[#allocation6 + $0x1b8] sm:$0xff]
    %v164 = vld [vmem:[#allocation6 + $0x1c0] sm:$0xff]
    %v165 = vld [vmem:[#allocation6 + $0x1c8] sm:$0xff]
    %v166 = vld [vmem:[#allocation6 + $0x1d0] sm:$0xff]
    %v167 = vld [vmem:[#allocation6 + $0x1d8] sm:$0xff]
    %v168 = vld [vmem:[#allocation6 + $0x1e0] sm:$0xff]
    %v169 = vld [vmem:[#allocation6 + $0x1e8] sm:$0xff]
    %v170 = vld [vmem:[#allocation6 + $0x1f0] sm:$0xff]
    %v171 = vld [vmem:[#allocation6 + $0x1f8] sm:$0xff]
    %v172 = vld [vmem:[#allocation9] sm:$0xf]
    %v174 = vperm.slane %v172, 0
    %v175 = vperm.slane %v172, 1
    %v176 = vperm.slane %v172, 2
    %v177 = vperm.slane %v172, 3
    %182 = vmatpush.msra.mxu0 %v168
    %183 = vmatpush.msra.mxu0 %v164
    %184 = vmatpush.msra.mxu0 %v160
    %185 = vmatpush.msra.mxu0 %v156
    %186 = vmatpush.msra.mxu0 %v152
    %187 = vmatpush.msra.mxu0 %v148
    %188 = vmatpush.msra.mxu0 %v144
    %189 = vmatpush.msra.mxu0 %v140
    %190 = vmatpush.msra.mxu0 %v136
    %191 = vmatpush.msra.mxu0 %v132
    %192 = vmatpush.msra.mxu0 %v128
    %193 = vmatpush.msra.mxu0 %v124
    %194 = vmatpush.msra.mxu0 %v120
    %195 = vmatpush.msra.mxu0 %v116
    %196 = vmatpush.msra.mxu0 %v112
    %197 = vmatpush.msra.mxu0 %v108
    %198 = vmatmul.f32.gmra.mxu0 %v100
    %v199 = vpop.f32.mrf.mxu0
    %v200 = vadd.f32 %v174, %v199
    %201 = vmatmul.f32.gmra.mxu0 %v101
    %v202 = vpop.f32.mrf.mxu0
    %v203 = vadd.f32 %v174, %v202
    %204 = vmatmul.f32.gmra.mxu0 %v102
    %v205 = vpop.f32.mrf.mxu0
    %v206 = vadd.f32 %v174, %v205
    %207 = vmatmul.f32.gmra.mxu0 %v103
    %v208 = vpop.f32.mrf.mxu0
    %v209 = vadd.f32 %v174, %v208
    %210 = vmatmul.f32.gmra.mxu0 %v104
    %v211 = vpop.f32.mrf.mxu0
    %v212 = vadd.f32 %v174, %v211
    %213 = vmatmul.f32.gmra.mxu0 %v105
    %v214 = vpop.f32.mrf.mxu0
    %v215 = vadd.f32 %v174, %v214
    %216 = vmatmul.f32.gmra.mxu0 %v106
    %v217 = vpop.f32.mrf.mxu0
    %v218 = vadd.f32 %v174, %v217
    %219 = vmatmul.f32.gmra.mxu0 %v107
    %v220 = vpop.f32.mrf.mxu0
    %v221 = vadd.f32 %v174, %v220
    %222 = vdwg.mxu0
    %223 = vmatpush.msra.mxu0 %v169
    %224 = vmatpush.msra.mxu0 %v165
    %225 = vmatpush.msra.mxu0 %v161
    %226 = vmatpush.msra.mxu0 %v157
    %227 = vmatpush.msra.mxu0 %v153
    %228 = vmatpush.msra.mxu0 %v149
    %229 = vmatpush.msra.mxu0 %v145
    %230 = vmatpush.msra.mxu0 %v141
    %231 = vmatpush.msra.mxu0 %v137
    %232 = vmatpush.msra.mxu0 %v133
    %233 = vmatpush.msra.mxu0 %v129
    %234 = vmatpush.msra.mxu0 %v125
    %235 = vmatpush.msra.mxu0 %v121
    %236 = vmatpush.msra.mxu0 %v117
    %237 = vmatpush.msra.mxu0 %v113
    %238 = vmatpush.msra.mxu0 %v109
    %239 = vmatmul.f32.gmra.mxu0 %v100
    %v240 = vpop.f32.mrf.mxu0
    %v241 = vadd.f32 %v175, %v240
    %242 = vmatmul.f32.gmra.mxu0 %v101
    %v243 = vpop.f32.mrf.mxu0
    %v244 = vadd.f32 %v175, %v243
    %245 = vmatmul.f32.gmra.mxu0 %v102
    %v246 = vpop.f32.mrf.mxu0
    %v247 = vadd.f32 %v175, %v246
    %248 = vmatmul.f32.gmra.mxu0 %v103
    %v249 = vpop.f32.mrf.mxu0
    %v250 = vadd.f32 %v175, %v249
    %251 = vmatmul.f32.gmra.mxu0 %v104
    %v252 = vpop.f32.mrf.mxu0
    %v253 = vadd.f32 %v175, %v252
    %254 = vmatmul.f32.gmra.mxu0 %v105
    %v255 = vpop.f32.mrf.mxu0
    %v256 = vadd.f32 %v175, %v255
    %257 = vmatmul.f32.gmra.mxu0 %v106
    %v258 = vpop.f32.mrf.mxu0
    %v259 = vadd.f32 %v175, %v258
    %260 = vmatmul.f32.gmra.mxu0 %v107
    %v261 = vpop.f32.mrf.mxu0
    %v262 = vadd.f32 %v175, %v261
    %263 = vdwg.mxu0
    %264 = vmatpush.msra.mxu0 %v170
    %265 = vmatpush.msra.mxu0 %v166
    %266 = vmatpush.msra.mxu0 %v162
    %267 = vmatpush.msra.mxu0 %v158
    %268 = vmatpush.msra.mxu0 %v154
    %269 = vmatpush.msra.mxu0 %v150
    %270 = vmatpush.msra.mxu0 %v146
    %271 = vmatpush.msra.mxu0 %v142
    %272 = vmatpush.msra.mxu0 %v138
    %273 = vmatpush.msra.mxu0 %v134
    %274 = vmatpush.msra.mxu0 %v130
    %275 = vmatpush.msra.mxu0 %v126
    %276 = vmatpush.msra.mxu0 %v122
    %277 = vmatpush.msra.mxu0 %v118
    %278 = vmatpush.msra.mxu0 %v114
    %279 = vmatpush.msra.mxu0 %v110
    %280 = vmatmul.f32.gmra.mxu0 %v100
    %v281 = vpop.f32.mrf.mxu0
    %v282 = vadd.f32 %v176, %v281
    %283 = vmatmul.f32.gmra.mxu0 %v101
    %v284 = vpop.f32.mrf.mxu0
    %v285 = vadd.f32 %v176, %v284
    %286 = vmatmul.f32.gmra.mxu0 %v102
    %v287 = vpop.f32.mrf.mxu0
    %v288 = vadd.f32 %v176, %v287
    %289 = vmatmul.f32.gmra.mxu0 %v103
    %v290 = vpop.f32.mrf.mxu0
    %v291 = vadd.f32 %v176, %v290
    %292 = vmatmul.f32.gmra.mxu0 %v104
    %v293 = vpop.f32.mrf.mxu0
    %v294 = vadd.f32 %v176, %v293
    %295 = vmatmul.f32.gmra.mxu0 %v105
    %v296 = vpop.f32.mrf.mxu0
    %v297 = vadd.f32 %v176, %v296
    %298 = vmatmul.f32.gmra.mxu0 %v106
    %v299 = vpop.f32.mrf.mxu0
    %v300 = vadd.f32 %v176, %v299
    %301 = vmatmul.f32.gmra.mxu0 %v107
    %v302 = vpop.f32.mrf.mxu0
    %v303 = vadd.f32 %v176, %v302
    %304 = vdwg.mxu0
    %305 = vmatpush.msra.mxu0 %v171
    %306 = vmatpush.msra.mxu0 %v167
    %307 = vmatpush.msra.mxu0 %v163
    %308 = vmatpush.msra.mxu0 %v159
    %309 = vmatpush.msra.mxu0 %v155
    %310 = vmatpush.msra.mxu0 %v151
    %311 = vmatpush.msra.mxu0 %v147
    %312 = vmatpush.msra.mxu0 %v143
    %313 = vmatpush.msra.mxu0 %v139
    %314 = vmatpush.msra.mxu0 %v135
    %315 = vmatpush.msra.mxu0 %v131
    %316 = vmatpush.msra.mxu0 %v127
    %317 = vmatpush.msra.mxu0 %v123
    %318 = vmatpush.msra.mxu0 %v119
    %319 = vmatpush.msra.mxu0 %v115
    %320 = vmatpush.msra.mxu0 %v111
    %321 = vmatmul.f32.gmra.mxu0 %v100
    %v322 = vpop.f32.mrf.mxu0
    %v323 = vadd.f32 %v177, %v322
    %324 = vmatmul.f32.gmra.mxu0 %v101
    %v325 = vpop.f32.mrf.mxu0
    %v326 = vadd.f32 %v177, %v325
    %327 = vmatmul.f32.gmra.mxu0 %v102
    %v328 = vpop.f32.mrf.mxu0
    %v329 = vadd.f32 %v177, %v328
    %330 = vmatmul.f32.gmra.mxu0 %v103
    %v331 = vpop.f32.mrf.mxu0
    %v332 = vadd.f32 %v177, %v331
    %333 = vmatmul.f32.gmra.mxu0 %v104
    %v334 = vpop.f32.mrf.mxu0
    %v335 = vadd.f32 %v177, %v334
    %336 = vmatmul.f32.gmra.mxu0 %v105
    %v337 = vpop.f32.mrf.mxu0
    %v338 = vadd.f32 %v177, %v337
    %339 = vmatmul.f32.gmra.mxu0 %v106
    %v340 = vpop.f32.mrf.mxu0
    %v341 = vadd.f32 %v177, %v340
    %342 = vmatmul.f32.gmra.mxu0 %v107
    %v343 = vpop.f32.mrf.mxu0
    %v344 = vadd.f32 %v177, %v343
    %345 = vdwg.mxu0
    %346 = vst [vmem:[#allocation2] sm:$0xff] %v200
    %347 = vst [vmem:[#allocation2 + $0x8] sm:$0xff] %v241
    %348 = vst [vmem:[#allocation2 + $0x10] sm:$0xff] %v282
    %349 = vst [vmem:[#allocation2 + $0x18] sm:$0xff] %v323
    %350 = vst [vmem:[#allocation2 + $0x20] sm:$0xff] %v203
    %351 = vst [vmem:[#allocation2 + $0x28] sm:$0xff] %v244
    %352 = vst [vmem:[#allocation2 + $0x30] sm:$0xff] %v285
    %353 = vst [vmem:[#allocation2 + $0x38] sm:$0xff] %v326
    %354 = vst [vmem:[#allocation2 + $0x40] sm:$0xff] %v206
    %355 = vst [vmem:[#allocation2 + $0x48] sm:$0xff] %v247
    %356 = vst [vmem:[#allocation2 + $0x50] sm:$0xff] %v288
    %357 = vst [vmem:[#allocation2 + $0x58] sm:$0xff] %v329
    %358 = vst [vmem:[#allocation2 + $0x60] sm:$0xff] %v209
    %359 = vst [vmem:[#allocation2 + $0x68] sm:$0xff] %v250
    %360 = vst [vmem:[#allocation2 + $0x70] sm:$0xff] %v291
    %361 = vst [vmem:[#allocation2 + $0x78] sm:$0xff] %v332
    %362 = vst [vmem:[#allocation2 + $0x80] sm:$0xff] %v212
    %363 = vst [vmem:[#allocation2 + $0x88] sm:$0xff] %v253
    %364 = vst [vmem:[#allocation2 + $0x90] sm:$0xff] %v294
    %365 = vst [vmem:[#allocation2 + $0x98] sm:$0xff] %v335
    %366 = vst [vmem:[#allocation2 + $0xa0] sm:$0xff] %v215
    %367 = vst [vmem:[#allocation2 + $0xa8] sm:$0xff] %v256
    %368 = vst [vmem:[#allocation2 + $0xb0] sm:$0xff] %v297
    %369 = vst [vmem:[#allocation2 + $0xb8] sm:$0xff] %v338
    %370 = vst [vmem:[#allocation2 + $0xc0] sm:$0xff] %v218
    %371 = vst [vmem:[#allocation2 + $0xc8] sm:$0xff] %v259
    %372 = vst [vmem:[#allocation2 + $0xd0] sm:$0xff] %v300
    %373 = vst [vmem:[#allocation2 + $0xd8] sm:$0xff] %v341
    %374 = vst [vmem:[#allocation2 + $0xe0] sm:$0xff] %v221
    %375 = vst [vmem:[#allocation2 + $0xe8] sm:$0xff] %v262
    %376 = vst [vmem:[#allocation2 + $0xf0] sm:$0xff] %v303
    %377 = vst [vmem:[#allocation2 + $0xf8] sm:$0xff] %v344
    %s378 = smul.u32 0, 4
    %s379 = smul.addr %s378, 8
    %s380 = scalar_lea.vmem [#allocation2], %s379
    %v381 = vld [vmem:[%s380] sm:$0xff]
    %v382 = vld [vmem:[%s380 + $0x8] sm:$0xff]
    %v383 = vld [vmem:[%s380 + $0x10] sm:$0xff]
    %v384 = vld [vmem:[%s380 + $0x18] sm:$0xff]
    %v385 = vld [vmem:[#allocation8] sm:$0xff]
    %v386 = vld [vmem:[#allocation8 + $0x8] sm:$0xff]
    %v387 = vld [vmem:[#allocation8 + $0x10] sm:$0xff]
    %v388 = vld [vmem:[#allocation8 + $0x18] sm:$0xff]
    %v389 = vld [vmem:[#allocation8 + $0x20] sm:$0xff]
    %v390 = vld [vmem:[#allocation8 + $0x28] sm:$0xff]
    %v391 = vld [vmem:[#allocation8 + $0x30] sm:$0xff]
    %v392 = vld [vmem:[#allocation8 + $0x38] sm:$0xff]
    %v393 = vld [vmem:[#allocation8 + $0x40] sm:$0xff]
    %v394 = vld [vmem:[#allocation8 + $0x48] sm:$0xff]
    %v395 = vld [vmem:[#allocation8 + $0x50] sm:$0xff]
    %v396 = vld [vmem:[#allocation8 + $0x58] sm:$0xff]
    %v397 = vld [vmem:[#allocation8 + $0x60] sm:$0xff]
    %v398 = vld [vmem:[#allocation8 + $0x68] sm:$0xff]
    %v399 = vld [vmem:[#allocation8 + $0x70] sm:$0xff]
    %v400 = vld [vmem:[#allocation8 + $0x78] sm:$0xff]
    %v401 = vld [vmem:[#allocation8 + $0x80] sm:$0xff]
    %v402 = vld [vmem:[#allocation8 + $0x88] sm:$0xff]
    %v403 = vld [vmem:[#allocation8 + $0x90] sm:$0xff]
    %v404 = vld [vmem:[#allocation8 + $0x98] sm:$0xff]
    %v405 = vld [vmem:[#allocation8 + $0xa0] sm:$0xff]
    %v406 = vld [vmem:[#allocation8 + $0xa8] sm:$0xff]
    %v407 = vld [vmem:[#allocation8 + $0xb0] sm:$0xff]
    %v408 = vld [vmem:[#allocation8 + $0xb8] sm:$0xff]
    %v409 = vld [vmem:[#allocation8 + $0xc0] sm:$0xff]
    %v410 = vld [vmem:[#allocation8 + $0xc8] sm:$0xff]
    %v411 = vld [vmem:[#allocation8 + $0xd0] sm:$0xff]
    %v412 = vld [vmem:[#allocation8 + $0xd8] sm:$0xff]
    %v413 = vld [vmem:[#allocation8 + $0xe0] sm:$0xff]
    %v414 = vld [vmem:[#allocation8 + $0xe8] sm:$0xff]
    %v415 = vld [vmem:[#allocation8 + $0xf0] sm:$0xff]
    %v416 = vld [vmem:[#allocation8 + $0xf8] sm:$0xff]
    %v417 = vld [vmem:[#allocation8 + $0x100] sm:$0xff]
    %v418 = vld [vmem:[#allocation8 + $0x108] sm:$0xff]
    %v419 = vld [vmem:[#allocation8 + $0x110] sm:$0xff]
    %v420 = vld [vmem:[#allocation8 + $0x118] sm:$0xff]
    %v421 = vld [vmem:[#allocation8 + $0x120] sm:$0xff]
    %v422 = vld [vmem:[#allocation8 + $0x128] sm:$0xff]
    %v423 = vld [vmem:[#allocation8 + $0x130] sm:$0xff]
    %v424 = vld [vmem:[#allocation8 + $0x138] sm:$0xff]
    %v425 = vld [vmem:[#allocation8 + $0x140] sm:$0xff]
    %v426 = vld [vmem:[#allocation8 + $0x148] sm:$0xff]
    %v427 = vld [vmem:[#allocation8 + $0x150] sm:$0xff]
    %v428 = vld [vmem:[#allocation8 + $0x158] sm:$0xff]
    %v429 = vld [vmem:[#allocation8 + $0x160] sm:$0xff]
    %v430 = vld [vmem:[#allocation8 + $0x168] sm:$0xff]
    %v431 = vld [vmem:[#allocation8 + $0x170] sm:$0xff]
    %v432 = vld [vmem:[#allocation8 + $0x178] sm:$0xff]
    %v433 = vld [vmem:[#allocation8 + $0x180] sm:$0xff]
    %v434 = vld [vmem:[#allocation8 + $0x188] sm:$0xff]
    %v435 = vld [vmem:[#allocation8 + $0x190] sm:$0xff]
    %v436 = vld [vmem:[#allocation8 + $0x198] sm:$0xff]
    %v437 = vld [vmem:[#allocation8 + $0x1a0] sm:$0xff]
    %v438 = vld [vmem:[#allocation8 + $0x1a8] sm:$0xff]
    %v439 = vld [vmem:[#allocation8 + $0x1b0] sm:$0xff]
    %v440 = vld [vmem:[#allocation8 + $0x1b8] sm:$0xff]
    %v441 = vld [vmem:[#allocation8 + $0x1c0] sm:$0xff]
    %v442 = vld [vmem:[#allocation8 + $0x1c8] sm:$0xff]
    %v443 = vld [vmem:[#allocation8 + $0x1d0] sm:$0xff]
    %v444 = vld [vmem:[#allocation8 + $0x1d8] sm:$0xff]
    %v445 = vld [vmem:[#allocation8 + $0x1e0] sm:$0xff]
    %v446 = vld [vmem:[#allocation8 + $0x1e8] sm:$0xff]
    %v447 = vld [vmem:[#allocation8 + $0x1f0] sm:$0xff]
    %v448 = vld [vmem:[#allocation8 + $0x1f8] sm:$0xff]
    %449 = vmatpush.msra.mxu0 %v445
    %450 = vmatpush.msra.mxu0 %v441
    %451 = vmatpush.msra.mxu0 %v437
    %452 = vmatpush.msra.mxu0 %v433
    %453 = vmatpush.msra.mxu0 %v429
    %454 = vmatpush.msra.mxu0 %v425
    %455 = vmatpush.msra.mxu0 %v421
    %456 = vmatpush.msra.mxu0 %v417
    %457 = vmatpush.msra.mxu0 %v413
    %458 = vmatpush.msra.mxu0 %v409
    %459 = vmatpush.msra.mxu0 %v405
    %460 = vmatpush.msra.mxu0 %v401
    %461 = vmatpush.msra.mxu0 %v397
    %462 = vmatpush.msra.mxu0 %v393
    %463 = vmatpush.msra.mxu0 %v389
    %464 = vmatpush.msra.mxu0 %v385
    %465 = vmatmul.f32.gmra.mxu0 0.0
    %v466 = vpop.f32.mrf.mxu0
    %v467 = vadd.f32 0.0, %v466
    %468 = vdwg.mxu0
    %469 = vmatpush.msra.mxu0 %v446
    %470 = vmatpush.msra.mxu0 %v442
    %471 = vmatpush.msra.mxu0 %v438
    %472 = vmatpush.msra.mxu0 %v434
    %473 = vmatpush.msra.mxu0 %v430
    %474 = vmatpush.msra.mxu0 %v426
    %475 = vmatpush.msra.mxu0 %v422
    %476 = vmatpush.msra.mxu0 %v418
    %477 = vmatpush.msra.mxu0 %v414
    %478 = vmatpush.msra.mxu0 %v410
    %479 = vmatpush.msra.mxu0 %v406
    %480 = vmatpush.msra.mxu0 %v402
    %481 = vmatpush.msra.mxu0 %v398
    %482 = vmatpush.msra.mxu0 %v394
    %483 = vmatpush.msra.mxu0 %v390
    %484 = vmatpush.msra.mxu0 %v386
    %485 = vmatmul.f32.gmra.mxu0 0.0
    %v486 = vpop.f32.mrf.mxu0
    %v487 = vadd.f32 0.0, %v486
    %488 = vdwg.mxu0
    %489 = vmatpush.msra.mxu0 %v447
    %490 = vmatpush.msra.mxu0 %v443
    %491 = vmatpush.msra.mxu0 %v439
    %492 = vmatpush.msra.mxu0 %v435
    %493 = vmatpush.msra.mxu0 %v431
    %494 = vmatpush.msra.mxu0 %v427
    %495 = vmatpush.msra.mxu0 %v423
    %496 = vmatpush.msra.mxu0 %v419
    %497 = vmatpush.msra.mxu0 %v415
    %498 = vmatpush.msra.mxu0 %v411
    %499 = vmatpush.msra.mxu0 %v407
    %500 = vmatpush.msra.mxu0 %v403
    %501 = vmatpush.msra.mxu0 %v399
    %502 = vmatpush.msra.mxu0 %v395
    %503 = vmatpush.msra.mxu0 %v391
    %504 = vmatpush.msra.mxu0 %v387
    %505 = vmatmul.f32.gmra.mxu0 0.0
    %v506 = vpop.f32.mrf.mxu0
    %v507 = vadd.f32 0.0, %v506
    %508 = vdwg.mxu0
    %509 = vmatpush.msra.mxu0 %v448
    %510 = vmatpush.msra.mxu0 %v444
    %511 = vmatpush.msra.mxu0 %v440
    %512 = vmatpush.msra.mxu0 %v436
    %513 = vmatpush.msra.mxu0 %v432
    %514 = vmatpush.msra.mxu0 %v428
    %515 = vmatpush.msra.mxu0 %v424
    %516 = vmatpush.msra.mxu0 %v420
    %517 = vmatpush.msra.mxu0 %v416
    %518 = vmatpush.msra.mxu0 %v412
    %519 = vmatpush.msra.mxu0 %v408
    %520 = vmatpush.msra.mxu0 %v404
    %521 = vmatpush.msra.mxu0 %v400
    %522 = vmatpush.msra.mxu0 %v396
    %523 = vmatpush.msra.mxu0 %v392
    %524 = vmatpush.msra.mxu0 %v388
    %525 = vmatmul.f32.gmra.mxu0 0.0
    %v526 = vpop.f32.mrf.mxu0
    %v527 = vadd.f32 0.0, %v526
    %528 = vdwg.mxu0
    %v529 = vadd.f32 %v381, %v467
    %v530 = vadd.f32 %v382, %v487
    %v531 = vadd.f32 %v383, %v507
    %v532 = vadd.f32 %v384, %v527
    %v533 = vxor.u32 %v529, 2147483648
    %v534 = vmul.f32 %v533, 1.442695
    %v535 = vpow.pop %v534
    %v536 = vadd.f32 %v535, 1.0
    %v537 = vrcp.pop %v536
    %v538 = vmul.f32 %v536, %v537
    %v539 = vsub.f32 1.0, %v538
    %v540 = vmul.f32 %v537, %v539
    %v541 = vadd.f32 %v537, %v540
    %vm542 = vweird.f32 %v536
    %vm543 = vweird.f32 %v537
    %vm544 = vmor %vm542, %vm543
    %v545 = vsel %vm544, %v537, %v541
    %v546 = vand.u32 2147483647, %v536
    %vm547 = vcmp.eq.f32.partialorder %v546, 8.507059e+37
    %v548 = vand.u32 %v536, 2147483648
    %v549 = vor.u32 1.1754944e-38, %v548
    %v550 = vsel %vm547, %v549, %v545
    %v551 = vmul.f32 1.0, %v550
    %v552 = vxor.u32 %v530, 2147483648
    %v553 = vmul.f32 %v552, 1.442695
    %v554 = vpow.pop %v553
    %v555 = vadd.f32 %v554, 1.0
    %v556 = vrcp.pop %v555
    %v557 = vmul.f32 %v555, %v556
    %v558 = vsub.f32 1.0, %v557
    %v559 = vmul.f32 %v556, %v558
    %v560 = vadd.f32 %v556, %v559
    %vm561 = vweird.f32 %v555
    %vm562 = vweird.f32 %v556
    %vm563 = vmor %vm561, %vm562
    %v564 = vsel %vm563, %v556, %v560
    %v565 = vand.u32 2147483647, %v555
    %vm566 = vcmp.eq.f32.partialorder %v565, 8.507059e+37
    %v567 = vand.u32 %v555, 2147483648
    %v568 = vor.u32 1.1754944e-38, %v567
    %v569 = vsel %vm566, %v568, %v564
    %v570 = vmul.f32 1.0, %v569
    %v571 = vtanh.pop %v531
    %v572 = vxor.u32 %v532, 2147483648
    %v573 = vmul.f32 %v572, 1.442695
    %v574 = vpow.pop %v573
    %v575 = vadd.f32 %v574, 1.0
    %v576 = vrcp.pop %v575
    %v577 = vmul.f32 %v575, %v576
    %v578 = vsub.f32 1.0, %v577
    %v579 = vmul.f32 %v576, %v578
    %v580 = vadd.f32 %v576, %v579
    %vm581 = vweird.f32 %v575
    %vm582 = vweird.f32 %v576
    %vm583 = vmor %vm581, %vm582
    %v584 = vsel %vm583, %v576, %v580
    %v585 = vand.u32 2147483647, %v575
    %vm586 = vcmp.eq.f32.partialorder %v585, 8.507059e+37
    %v587 = vand.u32 %v575, 2147483648
    %v588 = vor.u32 1.1754944e-38, %v587
    %v589 = vsel %vm586, %v588, %v584
    %v590 = vmul.f32 1.0, %v589
    %v591 = vmul.f32 %v570, 0.0
    %v592 = vmul.f32 %v551, %v571
    %v593 = vadd.f32 %v591, %v592
    %v594 = vtanh.pop %v593
    %v595 = vmul.f32 %v590, %v594
    %s596 = smul.u32 1, 4
    %s597 = smul.addr %s596, 8
    %s598 = scalar_lea.vmem [#allocation2], %s597
    %v599 = vld [vmem:[%s598] sm:$0xff]
    %v600 = vld [vmem:[%s598 + $0x8] sm:$0xff]
    %v601 = vld [vmem:[%s598 + $0x10] sm:$0xff]
    %v602 = vld [vmem:[%s598 + $0x18] sm:$0xff]
    %603 = vmatpush.msra.mxu0 %v445
    %604 = vmatpush.msra.mxu0 %v441
    %605 = vmatpush.msra.mxu0 %v437
    %606 = vmatpush.msra.mxu0 %v433
    %607 = vmatpush.msra.mxu0 %v429
    %608 = vmatpush.msra.mxu0 %v425
    %609 = vmatpush.msra.mxu0 %v421
    %610 = vmatpush.msra.mxu0 %v417
    %611 = vmatpush.msra.mxu0 %v413
    %612 = vmatpush.msra.mxu0 %v409
    %613 = vmatpush.msra.mxu0 %v405
    %614 = vmatpush.msra.mxu0 %v401
    %615 = vmatpush.msra.mxu0 %v397
    %616 = vmatpush.msra.mxu0 %v393
    %617 = vmatpush.msra.mxu0 %v389
    %618 = vmatpush.msra.mxu0 %v385
    %619 = vmatmul.f32.gmra.mxu0 %v595
    %v620 = vpop.f32.mrf.mxu0
    %v621 = vadd.f32 0.0, %v620
    %622 = vdwg.mxu0
    %623 = vmatpush.msra.mxu0 %v446
    %624 = vmatpush.msra.mxu0 %v442
    %625 = vmatpush.msra.mxu0 %v438
    %626 = vmatpush.msra.mxu0 %v434
    %627 = vmatpush.msra.mxu0 %v430
    %628 = vmatpush.msra.mxu0 %v426
    %629 = vmatpush.msra.mxu0 %v422
    %630 = vmatpush.msra.mxu0 %v418
    %631 = vmatpush.msra.mxu0 %v414
    %632 = vmatpush.msra.mxu0 %v410
    %633 = vmatpush.msra.mxu0 %v406
    %634 = vmatpush.msra.mxu0 %v402
    %635 = vmatpush.msra.mxu0 %v398
    %636 = vmatpush.msra.mxu0 %v394
    %637 = vmatpush.msra.mxu0 %v390
    %638 = vmatpush.msra.mxu0 %v386
    %639 = vmatmul.f32.gmra.mxu0 %v595
    %v640 = vpop.f32.mrf.mxu0
    %v641 = vadd.f32 0.0, %v640
    %642 = vdwg.mxu0
    %643 = vmatpush.msra.mxu0 %v447
    %644 = vmatpush.msra.mxu0 %v443
    %645 = vmatpush.msra.mxu0 %v439
    %646 = vmatpush.msra.mxu0 %v435
    %647 = vmatpush.msra.mxu0 %v431
    %648 = vmatpush.msra.mxu0 %v427
    %649 = vmatpush.msra.mxu0 %v423
    %650 = vmatpush.msra.mxu0 %v419
    %651 = vmatpush.msra.mxu0 %v415
    %652 = vmatpush.msra.mxu0 %v411
    %653 = vmatpush.msra.mxu0 %v407
    %654 = vmatpush.msra.mxu0 %v403
    %655 = vmatpush.msra.mxu0 %v399
    %656 = vmatpush.msra.mxu0 %v395
    %657 = vmatpush.msra.mxu0 %v391
    %658 = vmatpush.msra.mxu0 %v387
    %659 = vmatmul.f32.gmra.mxu0 %v595
    %v660 = vpop.f32.mrf.mxu0
    %v661 = vadd.f32 0.0, %v660
    %662 = vdwg.mxu0
    %663 = vmatpush.msra.mxu0 %v448
    %664 = vmatpush.msra.mxu0 %v444
    %665 = vmatpush.msra.mxu0 %v440
    %666 = vmatpush.msra.mxu0 %v436
    %667 = vmatpush.msra.mxu0 %v432
    %668 = vmatpush.msra.mxu0 %v428
    %669 = vmatpush.msra.mxu0 %v424
    %670 = vmatpush.msra.mxu0 %v420
    %671 = vmatpush.msra.mxu0 %v416
    %672 = vmatpush.msra.mxu0 %v412
    %673 = vmatpush.msra.mxu0 %v408
    %674 = vmatpush.msra.mxu0 %v404
    %675 = vmatpush.msra.mxu0 %v400
    %676 = vmatpush.msra.mxu0 %v396
    %677 = vmatpush.msra.mxu0 %v392
    %678 = vmatpush.msra.mxu0 %v388
    %679 = vmatmul.f32.gmra.mxu0 %v595
    %v680 = vpop.f32.mrf.mxu0
    %v681 = vadd.f32 0.0, %v680
    %682 = vdwg.mxu0
    %v683 = vadd.f32 %v599, %v621
    %v684 = vadd.f32 %v600, %v641
    %v685 = vadd.f32 %v601, %v661
    %v686 = vadd.f32 %v602, %v681
    %v687 = vxor.u32 %v683, 2147483648
    %v688 = vmul.f32 %v687, 1.442695
    %v689 = vpow.pop %v688
    %v690 = vadd.f32 %v689, 1.0
    %v691 = vrcp.pop %v690
    %v692 = vmul.f32 %v690, %v691
    %v693 = vsub.f32 1.0, %v692
    %v694 = vmul.f32 %v691, %v693
    %v695 = vadd.f32 %v691, %v694
    %vm696 = vweird.f32 %v690
    %vm697 = vweird.f32 %v691
    %vm698 = vmor %vm696, %vm697
    %v699 = vsel %vm698, %v691, %v695
    %v700 = vand.u32 2147483647, %v690
    %vm701 = vcmp.eq.f32.partialorder %v700, 8.507059e+37
    %v702 = vand.u32 %v690, 2147483648
    %v703 = vor.u32 1.1754944e-38, %v702
    %v704 = vsel %vm701, %v703, %v699
    %v705 = vmul.f32 1.0, %v704
    %v706 = vxor.u32 %v684, 2147483648
    %v707 = vmul.f32 %v706, 1.442695
    %v708 = vpow.pop %v707
    %v709 = vadd.f32 %v708, 1.0
    %v710 = vrcp.pop %v709
    %v711 = vmul.f32 %v709, %v710
    %v712 = vsub.f32 1.0, %v711
    %v713 = vmul.f32 %v710, %v712
    %v714 = vadd.f32 %v710, %v713
    %vm715 = vweird.f32 %v709
    %vm716 = vweird.f32 %v710
    %vm717 = vmor %vm715, %vm716
    %v718 = vsel %vm717, %v710, %v714
    %v719 = vand.u32 2147483647, %v709
    %vm720 = vcmp.eq.f32.partialorder %v719, 8.507059e+37
    %v721 = vand.u32 %v709, 2147483648
    %v722 = vor.u32 1.1754944e-38, %v721
    %v723 = vsel %vm720, %v722, %v718
    %v724 = vmul.f32 1.0, %v723
    %v725 = vtanh.pop %v685
    %v726 = vxor.u32 %v686, 2147483648
    %v727 = vmul.f32 %v726, 1.442695
    %v728 = vpow.pop %v727
    %v729 = vadd.f32 %v728, 1.0
    %v730 = vrcp.pop %v729
    %v731 = vmul.f32 %v729, %v730
    %v732 = vsub.f32 1.0, %v731
    %v733 = vmul.f32 %v730, %v732
    %v734 = vadd.f32 %v730, %v733
    %vm735 = vweird.f32 %v729
    %vm736 = vweird.f32 %v730
    %vm737 = vmor %vm735, %vm736
    %v738 = vsel %vm737, %v730, %v734
    %v739 = vand.u32 2147483647, %v729
    %vm740 = vcmp.eq.f32.partialorder %v739, 8.507059e+37
    %v741 = vand.u32 %v729, 2147483648
    %v742 = vor.u32 1.1754944e-38, %v741
    %v743 = vsel %vm740, %v742, %v738
    %v744 = vmul.f32 1.0, %v743
    %v745 = vmul.f32 %v724, %v593
    %v746 = vmul.f32 %v705, %v725
    %v747 = vadd.f32 %v745, %v746
    %v748 = vtanh.pop %v747
    %v749 = vmul.f32 %v744, %v748
    %s750 = smul.u32 2, 4
    %s751 = smul.addr %s750, 8
    %s752 = scalar_lea.vmem [#allocation2], %s751
    %v753 = vld [vmem:[%s752] sm:$0xff]
    %v754 = vld [vmem:[%s752 + $0x8] sm:$0xff]
    %v755 = vld [vmem:[%s752 + $0x10] sm:$0xff]
    %v756 = vld [vmem:[%s752 + $0x18] sm:$0xff]
    %757 = vmatpush.msra.mxu0 %v445
    %758 = vmatpush.msra.mxu0 %v441
    %759 = vmatpush.msra.mxu0 %v437
    %760 = vmatpush.msra.mxu0 %v433
    %761 = vmatpush.msra.mxu0 %v429
    %762 = vmatpush.msra.mxu0 %v425
    %763 = vmatpush.msra.mxu0 %v421
    %764 = vmatpush.msra.mxu0 %v417
    %765 = vmatpush.msra.mxu0 %v413
    %766 = vmatpush.msra.mxu0 %v409
    %767 = vmatpush.msra.mxu0 %v405
    %768 = vmatpush.msra.mxu0 %v401
    %769 = vmatpush.msra.mxu0 %v397
    %770 = vmatpush.msra.mxu0 %v393
    %771 = vmatpush.msra.mxu0 %v389
    %772 = vmatpush.msra.mxu0 %v385
    %773 = vmatmul.f32.gmra.mxu0 %v749
    %v774 = vpop.f32.mrf.mxu0
    %v775 = vadd.f32 0.0, %v774
    %776 = vdwg.mxu0
    %777 = vmatpush.msra.mxu0 %v446
    %778 = vmatpush.msra.mxu0 %v442
    %779 = vmatpush.msra.mxu0 %v438
    %780 = vmatpush.msra.mxu0 %v434
    %781 = vmatpush.msra.mxu0 %v430
    %782 = vmatpush.msra.mxu0 %v426
    %783 = vmatpush.msra.mxu0 %v422
    %784 = vmatpush.msra.mxu0 %v418
    %785 = vmatpush.msra.mxu0 %v414
    %786 = vmatpush.msra.mxu0 %v410
    %787 = vmatpush.msra.mxu0 %v406
    %788 = vmatpush.msra.mxu0 %v402
    %789 = vmatpush.msra.mxu0 %v398
    %790 = vmatpush.msra.mxu0 %v394
    %791 = vmatpush.msra.mxu0 %v390
    %792 = vmatpush.msra.mxu0 %v386
    %793 = vmatmul.f32.gmra.mxu0 %v749
    %v794 = vpop.f32.mrf.mxu0
    %v795 = vadd.f32 0.0, %v794
    %796 = vdwg.mxu0
    %797 = vmatpush.msra.mxu0 %v447
    %798 = vmatpush.msra.mxu0 %v443
    %799 = vmatpush.msra.mxu0 %v439
    %800 = vmatpush.msra.mxu0 %v435
    %801 = vmatpush.msra.mxu0 %v431
    %802 = vmatpush.msra.mxu0 %v427
    %803 = vmatpush.msra.mxu0 %v423
    %804 = vmatpush.msra.mxu0 %v419
    %805 = vmatpush.msra.mxu0 %v415
    %806 = vmatpush.msra.mxu0 %v411
    %807 = vmatpush.msra.mxu0 %v407
    %808 = vmatpush.msra.mxu0 %v403
    %809 = vmatpush.msra.mxu0 %v399
    %810 = vmatpush.msra.mxu0 %v395
    %811 = vmatpush.msra.mxu0 %v391
    %812 = vmatpush.msra.mxu0 %v387
    %813 = vmatmul.f32.gmra.mxu0 %v749
    %v814 = vpop.f32.mrf.mxu0
    %v815 = vadd.f32 0.0, %v814
    %816 = vdwg.mxu0
    %817 = vmatpush.msra.mxu0 %v448
    %818 = vmatpush.msra.mxu0 %v444
    %819 = vmatpush.msra.mxu0 %v440
    %820 = vmatpush.msra.mxu0 %v436
    %821 = vmatpush.msra.mxu0 %v432
    %822 = vmatpush.msra.mxu0 %v428
    %823 = vmatpush.msra.mxu0 %v424
    %824 = vmatpush.msra.mxu0 %v420
    %825 = vmatpush.msra.mxu0 %v416
    %826 = vmatpush.msra.mxu0 %v412
    %827 = vmatpush.msra.mxu0 %v408
    %828 = vmatpush.msra.mxu0 %v404
    %829 = vmatpush.msra.mxu0 %v400
    %830 = vmatpush.msra.mxu0 %v396
    %831 = vmatpush.msra.mxu0 %v392
    %832 = vmatpush.msra.mxu0 %v388
    %833 = vmatmul.f32.gmra.mxu0 %v749
    %v834 = vpop.f32.mrf.mxu0
    %v835 = vadd.f32 0.0, %v834
    %836 = vdwg.mxu0
    %v837 = vadd.f32 %v753, %v775
    %v838 = vadd.f32 %v754, %v795
    %v839 = vadd.f32 %v755, %v815
    %v840 = vadd.f32 %v756, %v835
    %v841 = vxor.u32 %v837, 2147483648
    %v842 = vmul.f32 %v841, 1.442695
    %v843 = vpow.pop %v842
    %v844 = vadd.f32 %v843, 1.0
    %v845 = vrcp.pop %v844
    %v846 = vmul.f32 %v844, %v845
    %v847 = vsub.f32 1.0, %v846
    %v848 = vmul.f32 %v845, %v847
    %v849 = vadd.f32 %v845, %v848
    %vm850 = vweird.f32 %v844
    %vm851 = vweird.f32 %v845
    %vm852 = vmor %vm850, %vm851
    %v853 = vsel %vm852, %v845, %v849
    %v854 = vand.u32 2147483647, %v844
    %vm855 = vcmp.eq.f32.partialorder %v854, 8.507059e+37
    %v856 = vand.u32 %v844, 2147483648
    %v857 = vor.u32 1.1754944e-38, %v856
    %v858 = vsel %vm855, %v857, %v853
    %v859 = vmul.f32 1.0, %v858
    %v860 = vxor.u32 %v838, 2147483648
    %v861 = vmul.f32 %v860, 1.442695
    %v862 = vpow.pop %v861
    %v863 = vadd.f32 %v862, 1.0
    %v864 = vrcp.pop %v863
    %v865 = vmul.f32 %v863, %v864
    %v866 = vsub.f32 1.0, %v865
    %v867 = vmul.f32 %v864, %v866
    %v868 = vadd.f32 %v864, %v867
    %vm869 = vweird.f32 %v863
    %vm870 = vweird.f32 %v864
    %vm871 = vmor %vm869, %vm870
    %v872 = vsel %vm871, %v864, %v868
    %v873 = vand.u32 2147483647, %v863
    %vm874 = vcmp.eq.f32.partialorder %v873, 8.507059e+37
    %v875 = vand.u32 %v863, 2147483648
    %v876 = vor.u32 1.1754944e-38, %v875
    %v877 = vsel %vm874, %v876, %v872
    %v878 = vmul.f32 1.0, %v877
    %v879 = vtanh.pop %v839
    %v880 = vxor.u32 %v840, 2147483648
    %v881 = vmul.f32 %v880, 1.442695
    %v882 = vpow.pop %v881
    %v883 = vadd.f32 %v882, 1.0
    %v884 = vrcp.pop %v883
    %v885 = vmul.f32 %v883, %v884
    %v886 = vsub.f32 1.0, %v885
    %v887 = vmul.f32 %v884, %v886
    %v888 = vadd.f32 %v884, %v887
    %vm889 = vweird.f32 %v883
    %vm890 = vweird.f32 %v884
    %vm891 = vmor %vm889, %vm890
    %v892 = vsel %vm891, %v884, %v888
    %v893 = vand.u32 2147483647, %v883
    %vm894 = vcmp.eq.f32.partialorder %v893, 8.507059e+37
    %v895 = vand.u32 %v883, 2147483648
    %v896 = vor.u32 1.1754944e-38, %v895
    %v897 = vsel %vm894, %v896, %v892
    %v898 = vmul.f32 1.0, %v897
    %v899 = vmul.f32 %v878, %v747
    %v900 = vmul.f32 %v859, %v879
    %v901 = vadd.f32 %v899, %v900
    %v902 = vtanh.pop %v901
    %v903 = vmul.f32 %v898, %v902
    %s904 = smul.u32 3, 4
    %s905 = smul.addr %s904, 8
    %s906 = scalar_lea.vmem [#allocation2], %s905
    %v907 = vld [vmem:[%s906] sm:$0xff]
    %v908 = vld [vmem:[%s906 + $0x8] sm:$0xff]
    %v909 = vld [vmem:[%s906 + $0x10] sm:$0xff]
    %v910 = vld [vmem:[%s906 + $0x18] sm:$0xff]
    %911 = vmatpush.msra.mxu0 %v445
    %912 = vmatpush.msra.mxu0 %v441
    %913 = vmatpush.msra.mxu0 %v437
    %914 = vmatpush.msra.mxu0 %v433
    %915 = vmatpush.msra.mxu0 %v429
    %916 = vmatpush.msra.mxu0 %v425
    %917 = vmatpush.msra.mxu0 %v421
    %918 = vmatpush.msra.mxu0 %v417
    %919 = vmatpush.msra.mxu0 %v413
    %920 = vmatpush.msra.mxu0 %v409
    %921 = vmatpush.msra.mxu0 %v405
    %922 = vmatpush.msra.mxu0 %v401
    %923 = vmatpush.msra.mxu0 %v397
    %924 = vmatpush.msra.mxu0 %v393
    %925 = vmatpush.msra.mxu0 %v389
    %926 = vmatpush.msra.mxu0 %v385
    %927 = vmatmul.f32.gmra.mxu0 %v903
    %v928 = vpop.f32.mrf.mxu0
    %v929 = vadd.f32 0.0, %v928
    %930 = vdwg.mxu0
    %931 = vmatpush.msra.mxu0 %v446
    %932 = vmatpush.msra.mxu0 %v442
    %933 = vmatpush.msra.mxu0 %v438
    %934 = vmatpush.msra.mxu0 %v434
    %935 = vmatpush.msra.mxu0 %v430
    %936 = vmatpush.msra.mxu0 %v426
    %937 = vmatpush.msra.mxu0 %v422
    %938 = vmatpush.msra.mxu0 %v418
    %939 = vmatpush.msra.mxu0 %v414
    %940 = vmatpush.msra.mxu0 %v410
    %941 = vmatpush.msra.mxu0 %v406
    %942 = vmatpush.msra.mxu0 %v402
    %943 = vmatpush.msra.mxu0 %v398
    %944 = vmatpush.msra.mxu0 %v394
    %945 = vmatpush.msra.mxu0 %v390
    %946 = vmatpush.msra.mxu0 %v386
    %947 = vmatmul.f32.gmra.mxu0 %v903
    %v948 = vpop.f32.mrf.mxu0
    %v949 = vadd.f32 0.0, %v948
    %950 = vdwg.mxu0
    %951 = vmatpush.msra.mxu0 %v447
    %952 = vmatpush.msra.mxu0 %v443
    %953 = vmatpush.msra.mxu0 %v439
    %954 = vmatpush.msra.mxu0 %v435
    %955 = vmatpush.msra.mxu0 %v431
    %956 = vmatpush.msra.mxu0 %v427
    %957 = vmatpush.msra.mxu0 %v423
    %958 = vmatpush.msra.mxu0 %v419
    %959 = vmatpush.msra.mxu0 %v415
    %960 = vmatpush.msra.mxu0 %v411
    %961 = vmatpush.msra.mxu0 %v407
    %962 = vmatpush.msra.mxu0 %v403
    %963 = vmatpush.msra.mxu0 %v399
    %964 = vmatpush.msra.mxu0 %v395
    %965 = vmatpush.msra.mxu0 %v391
    %966 = vmatpush.msra.mxu0 %v387
    %967 = vmatmul.f32.gmra.mxu0 %v903
    %v968 = vpop.f32.mrf.mxu0
    %v969 = vadd.f32 0.0, %v968
    %970 = vdwg.mxu0
    %971 = vmatpush.msra.mxu0 %v448
    %972 = vmatpush.msra.mxu0 %v444
    %973 = vmatpush.msra.mxu0 %v440
    %974 = vmatpush.msra.mxu0 %v436
    %975 = vmatpush.msra.mxu0 %v432
    %976 = vmatpush.msra.mxu0 %v428
    %977 = vmatpush.msra.mxu0 %v424
    %978 = vmatpush.msra.mxu0 %v420
    %979 = vmatpush.msra.mxu0 %v416
    %980 = vmatpush.msra.mxu0 %v412
    %981 = vmatpush.msra.mxu0 %v408
    %982 = vmatpush.msra.mxu0 %v404
    %983 = vmatpush.msra.mxu0 %v400
    %984 = vmatpush.msra.mxu0 %v396
    %985 = vmatpush.msra.mxu0 %v392
    %986 = vmatpush.msra.mxu0 %v388
    %987 = vmatmul.f32.gmra.mxu0 %v903
    %v988 = vpop.f32.mrf.mxu0
    %v989 = vadd.f32 0.0, %v988
    %990 = vdwg.mxu0
    %v991 = vadd.f32 %v907, %v929
    %v992 = vadd.f32 %v908, %v949
    %v993 = vadd.f32 %v909, %v969
    %v994 = vadd.f32 %v910, %v989
    %v995 = vxor.u32 %v991, 2147483648
    %v996 = vmul.f32 %v995, 1.442695
    %v997 = vpow.pop %v996
    %v998 = vadd.f32 %v997, 1.0
    %v999 = vrcp.pop %v998
    %v1000 = vmul.f32 %v998, %v999
    %v1001 = vsub.f32 1.0, %v1000
    %v1002 = vmul.f32 %v999, %v1001
    %v1003 = vadd.f32 %v999, %v1002
    %vm1004 = vweird.f32 %v998
    %vm1005 = vweird.f32 %v999
    %vm1006 = vmor %vm1004, %vm1005
    %v1007 = vsel %vm1006, %v999, %v1003
    %v1008 = vand.u32 2147483647, %v998
    %vm1009 = vcmp.eq.f32.partialorder %v1008, 8.507059e+37
    %v1010 = vand.u32 %v998, 2147483648
    %v1011 = vor.u32 1.1754944e-38, %v1010
    %v1012 = vsel %vm1009, %v1011, %v1007
    %v1013 = vmul.f32 1.0, %v1012
    %v1014 = vxor.u32 %v992, 2147483648
    %v1015 = vmul.f32 %v1014, 1.442695
    %v1016 = vpow.pop %v1015
    %v1017 = vadd.f32 %v1016, 1.0
    %v1018 = vrcp.pop %v1017
    %v1019 = vmul.f32 %v1017, %v1018
    %v1020 = vsub.f32 1.0, %v1019
    %v1021 = vmul.f32 %v1018, %v1020
    %v1022 = vadd.f32 %v1018, %v1021
    %vm1023 = vweird.f32 %v1017
    %vm1024 = vweird.f32 %v1018
    %vm1025 = vmor %vm1023, %vm1024
    %v1026 = vsel %vm1025, %v1018, %v1022
    %v1027 = vand.u32 2147483647, %v1017
    %vm1028 = vcmp.eq.f32.partialorder %v1027, 8.507059e+37
    %v1029 = vand.u32 %v1017, 2147483648
    %v1030 = vor.u32 1.1754944e-38, %v1029
    %v1031 = vsel %vm1028, %v1030, %v1026
    %v1032 = vmul.f32 1.0, %v1031
    %v1033 = vtanh.pop %v993
    %v1034 = vxor.u32 %v994, 2147483648
    %v1035 = vmul.f32 %v1034, 1.442695
    %v1036 = vpow.pop %v1035
    %v1037 = vadd.f32 %v1036, 1.0
    %v1038 = vrcp.pop %v1037
    %v1039 = vmul.f32 %v1037, %v1038
    %v1040 = vsub.f32 1.0, %v1039
    %v1041 = vmul.f32 %v1038, %v1040
    %v1042 = vadd.f32 %v1038, %v1041
    %vm1043 = vweird.f32 %v1037
    %vm1044 = vweird.f32 %v1038
    %vm1045 = vmor %vm1043, %vm1044
    %v1046 = vsel %vm1045, %v1038, %v1042
    %v1047 = vand.u32 2147483647, %v1037
    %vm1048 = vcmp.eq.f32.partialorder %v1047, 8.507059e+37
    %v1049 = vand.u32 %v1037, 2147483648
    %v1050 = vor.u32 1.1754944e-38, %v1049
    %v1051 = vsel %vm1048, %v1050, %v1046
    %v1052 = vmul.f32 1.0, %v1051
    %v1053 = vmul.f32 %v1032, %v901
    %v1054 = vmul.f32 %v1013, %v1033
    %v1055 = vadd.f32 %v1053, %v1054
    %v1056 = vtanh.pop %v1055
    %v1057 = vmul.f32 %v1052, %v1056
    %s1058 = smul.u32 4, 4
    %s1059 = smul.addr %s1058, 8
    %s1060 = scalar_lea.vmem [#allocation2], %s1059
    %v1061 = vld [vmem:[%s1060] sm:$0xff]
    %v1062 = vld [vmem:[%s1060 + $0x8] sm:$0xff]
    %v1063 = vld [vmem:[%s1060 + $0x10] sm:$0xff]
    %v1064 = vld [vmem:[%s1060 + $0x18] sm:$0xff]
    %1065 = vmatpush.msra.mxu0 %v445
    %1066 = vmatpush.msra.mxu0 %v441
    %1067 = vmatpush.msra.mxu0 %v437
    %1068 = vmatpush.msra.mxu0 %v433
    %1069 = vmatpush.msra.mxu0 %v429
    %1070 = vmatpush.msra.mxu0 %v425
    %1071 = vmatpush.msra.mxu0 %v421
    %1072 = vmatpush.msra.mxu0 %v417
    %1073 = vmatpush.msra.mxu0 %v413
    %1074 = vmatpush.msra.mxu0 %v409
    %1075 = vmatpush.msra.mxu0 %v405
    %1076 = vmatpush.msra.mxu0 %v401
    %1077 = vmatpush.msra.mxu0 %v397
    %1078 = vmatpush.msra.mxu0 %v393
    %1079 = vmatpush.msra.mxu0 %v389
    %1080 = vmatpush.msra.mxu0 %v385
    %1081 = vmatmul.f32.gmra.mxu0 %v1057
    %v1082 = vpop.f32.mrf.mxu0
    %v1083 = vadd.f32 0.0, %v1082
    %1084 = vdwg.mxu0
    %1085 = vmatpush.msra.mxu0 %v446
    %1086 = vmatpush.msra.mxu0 %v442
    %1087 = vmatpush.msra.mxu0 %v438
    %1088 = vmatpush.msra.mxu0 %v434
    %1089 = vmatpush.msra.mxu0 %v430
    %1090 = vmatpush.msra.mxu0 %v426
    %1091 = vmatpush.msra.mxu0 %v422
    %1092 = vmatpush.msra.mxu0 %v418
    %1093 = vmatpush.msra.mxu0 %v414
    %1094 = vmatpush.msra.mxu0 %v410
    %1095 = vmatpush.msra.mxu0 %v406
    %1096 = vmatpush.msra.mxu0 %v402
    %1097 = vmatpush.msra.mxu0 %v398
    %1098 = vmatpush.msra.mxu0 %v394
    %1099 = vmatpush.msra.mxu0 %v390
    %1100 = vmatpush.msra.mxu0 %v386
    %1101 = vmatmul.f32.gmra.mxu0 %v1057
    %v1102 = vpop.f32.mrf.mxu0
    %v1103 = vadd.f32 0.0, %v1102
    %1104 = vdwg.mxu0
    %1105 = vmatpush.msra.mxu0 %v447
    %1106 = vmatpush.msra.mxu0 %v443
    %1107 = vmatpush.msra.mxu0 %v439
    %1108 = vmatpush.msra.mxu0 %v435
    %1109 = vmatpush.msra.mxu0 %v431
    %1110 = vmatpush.msra.mxu0 %v427
    %1111 = vmatpush.msra.mxu0 %v423
    %1112 = vmatpush.msra.mxu0 %v419
    %1113 = vmatpush.msra.mxu0 %v415
    %1114 = vmatpush.msra.mxu0 %v411
    %1115 = vmatpush.msra.mxu0 %v407
    %1116 = vmatpush.msra.mxu0 %v403
    %1117 = vmatpush.msra.mxu0 %v399
    %1118 = vmatpush.msra.mxu0 %v395
    %1119 = vmatpush.msra.mxu0 %v391
    %1120 = vmatpush.msra.mxu0 %v387
    %1121 = vmatmul.f32.gmra.mxu0 %v1057
    %v1122 = vpop.f32.mrf.mxu0
    %v1123 = vadd.f32 0.0, %v1122
    %1124 = vdwg.mxu0
    %1125 = vmatpush.msra.mxu0 %v448
    %1126 = vmatpush.msra.mxu0 %v444
    %1127 = vmatpush.msra.mxu0 %v440
    %1128 = vmatpush.msra.mxu0 %v436
    %1129 = vmatpush.msra.mxu0 %v432
    %1130 = vmatpush.msra.mxu0 %v428
    %1131 = vmatpush.msra.mxu0 %v424
    %1132 = vmatpush.msra.mxu0 %v420
    %1133 = vmatpush.msra.mxu0 %v416
    %1134 = vmatpush.msra.mxu0 %v412
    %1135 = vmatpush.msra.mxu0 %v408
    %1136 = vmatpush.msra.mxu0 %v404
    %1137 = vmatpush.msra.mxu0 %v400
    %1138 = vmatpush.msra.mxu0 %v396
    %1139 = vmatpush.msra.mxu0 %v392
    %1140 = vmatpush.msra.mxu0 %v388
    %1141 = vmatmul.f32.gmra.mxu0 %v1057
    %v1142 = vpop.f32.mrf.mxu0
    %v1143 = vadd.f32 0.0, %v1142
    %1144 = vdwg.mxu0
    %v1145 = vadd.f32 %v1061, %v1083
    %v1146 = vadd.f32 %v1062, %v1103
    %v1147 = vadd.f32 %v1063, %v1123
    %v1148 = vadd.f32 %v1064, %v1143
    %v1149 = vxor.u32 %v1145, 2147483648
    %v1150 = vmul.f32 %v1149, 1.442695
    %v1151 = vpow.pop %v1150
    %v1152 = vadd.f32 %v1151, 1.0
    %v1153 = vrcp.pop %v1152
    %v1154 = vmul.f32 %v1152, %v1153
    %v1155 = vsub.f32 1.0, %v1154
    %v1156 = vmul.f32 %v1153, %v1155
    %v1157 = vadd.f32 %v1153, %v1156
    %vm1158 = vweird.f32 %v1152
    %vm1159 = vweird.f32 %v1153
    %vm1160 = vmor %vm1158, %vm1159
    %v1161 = vsel %vm1160, %v1153, %v1157
    %v1162 = vand.u32 2147483647, %v1152
    %vm1163 = vcmp.eq.f32.partialorder %v1162, 8.507059e+37
    %v1164 = vand.u32 %v1152, 2147483648
    %v1165 = vor.u32 1.1754944e-38, %v1164
    %v1166 = vsel %vm1163, %v1165, %v1161
    %v1167 = vmul.f32 1.0, %v1166
    %v1168 = vxor.u32 %v1146, 2147483648
    %v1169 = vmul.f32 %v1168, 1.442695
    %v1170 = vpow.pop %v1169
    %v1171 = vadd.f32 %v1170, 1.0
    %v1172 = vrcp.pop %v1171
    %v1173 = vmul.f32 %v1171, %v1172
    %v1174 = vsub.f32 1.0, %v1173
    %v1175 = vmul.f32 %v1172, %v1174
    %v1176 = vadd.f32 %v1172, %v1175
    %vm1177 = vweird.f32 %v1171
    %vm1178 = vweird.f32 %v1172
    %vm1179 = vmor %vm1177, %vm1178
    %v1180 = vsel %vm1179, %v1172, %v1176
    %v1181 = vand.u32 2147483647, %v1171
    %vm1182 = vcmp.eq.f32.partialorder %v1181, 8.507059e+37
    %v1183 = vand.u32 %v1171, 2147483648
    %v1184 = vor.u32 1.1754944e-38, %v1183
    %v1185 = vsel %vm1182, %v1184, %v1180
    %v1186 = vmul.f32 1.0, %v1185
    %v1187 = vtanh.pop %v1147
    %v1188 = vxor.u32 %v1148, 2147483648
    %v1189 = vmul.f32 %v1188, 1.442695
    %v1190 = vpow.pop %v1189
    %v1191 = vadd.f32 %v1190, 1.0
    %v1192 = vrcp.pop %v1191
    %v1193 = vmul.f32 %v1191, %v1192
    %v1194 = vsub.f32 1.0, %v1193
    %v1195 = vmul.f32 %v1192, %v1194
    %v1196 = vadd.f32 %v1192, %v1195
    %vm1197 = vweird.f32 %v1191
    %vm1198 = vweird.f32 %v1192
    %vm1199 = vmor %vm1197, %vm1198
    %v1200 = vsel %vm1199, %v1192, %v1196
    %v1201 = vand.u32 2147483647, %v1191
    %vm1202 = vcmp.eq.f32.partialorder %v1201, 8.507059e+37
    %v1203 = vand.u32 %v1191, 2147483648
    %v1204 = vor.u32 1.1754944e-38, %v1203
    %v1205 = vsel %vm1202, %v1204, %v1200
    %v1206 = vmul.f32 1.0, %v1205
    %v1207 = vmul.f32 %v1186, %v1055
    %v1208 = vmul.f32 %v1167, %v1187
    %v1209 = vadd.f32 %v1207, %v1208
    %v1210 = vtanh.pop %v1209
    %v1211 = vmul.f32 %v1206, %v1210
    %s1212 = smul.u32 5, 4
    %s1213 = smul.addr %s1212, 8
    %s1214 = scalar_lea.vmem [#allocation2], %s1213
    %v1215 = vld [vmem:[%s1214] sm:$0xff]
    %v1216 = vld [vmem:[%s1214 + $0x8] sm:$0xff]
    %v1217 = vld [vmem:[%s1214 + $0x10] sm:$0xff]
    %v1218 = vld [vmem:[%s1214 + $0x18] sm:$0xff]
    %1219 = vmatpush.msra.mxu0 %v445
    %1220 = vmatpush.msra.mxu0 %v441
    %1221 = vmatpush.msra.mxu0 %v437
    %1222 = vmatpush.msra.mxu0 %v433
    %1223 = vmatpush.msra.mxu0 %v429
    %1224 = vmatpush.msra.mxu0 %v425
    %1225 = vmatpush.msra.mxu0 %v421
    %1226 = vmatpush.msra.mxu0 %v417
    %1227 = vmatpush.msra.mxu0 %v413
    %1228 = vmatpush.msra.mxu0 %v409
    %1229 = vmatpush.msra.mxu0 %v405
    %1230 = vmatpush.msra.mxu0 %v401
    %1231 = vmatpush.msra.mxu0 %v397
    %1232 = vmatpush.msra.mxu0 %v393
    %1233 = vmatpush.msra.mxu0 %v389
    %1234 = vmatpush.msra.mxu0 %v385
    %1235 = vmatmul.f32.gmra.mxu0 %v1211
    %v1236 = vpop.f32.mrf.mxu0
    %v1237 = vadd.f32 0.0, %v1236
    %1238 = vdwg.mxu0
    %1239 = vmatpush.msra.mxu0 %v446
    %1240 = vmatpush.msra.mxu0 %v442
    %1241 = vmatpush.msra.mxu0 %v438
    %1242 = vmatpush.msra.mxu0 %v434
    %1243 = vmatpush.msra.mxu0 %v430
    %1244 = vmatpush.msra.mxu0 %v426
    %1245 = vmatpush.msra.mxu0 %v422
    %1246 = vmatpush.msra.mxu0 %v418
    %1247 = vmatpush.msra.mxu0 %v414
    %1248 = vmatpush.msra.mxu0 %v410
    %1249 = vmatpush.msra.mxu0 %v406
    %1250 = vmatpush.msra.mxu0 %v402
    %1251 = vmatpush.msra.mxu0 %v398
    %1252 = vmatpush.msra.mxu0 %v394
    %1253 = vmatpush.msra.mxu0 %v390
    %1254 = vmatpush.msra.mxu0 %v386
    %1255 = vmatmul.f32.gmra.mxu0 %v1211
    %v1256 = vpop.f32.mrf.mxu0
    %v1257 = vadd.f32 0.0, %v1256
    %1258 = vdwg.mxu0
    %1259 = vmatpush.msra.mxu0 %v447
    %1260 = vmatpush.msra.mxu0 %v443
    %1261 = vmatpush.msra.mxu0 %v439
    %1262 = vmatpush.msra.mxu0 %v435
    %1263 = vmatpush.msra.mxu0 %v431
    %1264 = vmatpush.msra.mxu0 %v427
    %1265 = vmatpush.msra.mxu0 %v423
    %1266 = vmatpush.msra.mxu0 %v419
    %1267 = vmatpush.msra.mxu0 %v415
    %1268 = vmatpush.msra.mxu0 %v411
    %1269 = vmatpush.msra.mxu0 %v407
    %1270 = vmatpush.msra.mxu0 %v403
    %1271 = vmatpush.msra.mxu0 %v399
    %1272 = vmatpush.msra.mxu0 %v395
    %1273 = vmatpush.msra.mxu0 %v391
    %1274 = vmatpush.msra.mxu0 %v387
    %1275 = vmatmul.f32.gmra.mxu0 %v1211
    %v1276 = vpop.f32.mrf.mxu0
    %v1277 = vadd.f32 0.0, %v1276
    %1278 = vdwg.mxu0
    %1279 = vmatpush.msra.mxu0 %v448
    %1280 = vmatpush.msra.mxu0 %v444
    %1281 = vmatpush.msra.mxu0 %v440
    %1282 = vmatpush.msra.mxu0 %v436
    %1283 = vmatpush.msra.mxu0 %v432
    %1284 = vmatpush.msra.mxu0 %v428
    %1285 = vmatpush.msra.mxu0 %v424
    %1286 = vmatpush.msra.mxu0 %v420
    %1287 = vmatpush.msra.mxu0 %v416
    %1288 = vmatpush.msra.mxu0 %v412
    %1289 = vmatpush.msra.mxu0 %v408
    %1290 = vmatpush.msra.mxu0 %v404
    %1291 = vmatpush.msra.mxu0 %v400
    %1292 = vmatpush.msra.mxu0 %v396
    %1293 = vmatpush.msra.mxu0 %v392
    %1294 = vmatpush.msra.mxu0 %v388
    %1295 = vmatmul.f32.gmra.mxu0 %v1211
    %v1296 = vpop.f32.mrf.mxu0
    %v1297 = vadd.f32 0.0, %v1296
    %1298 = vdwg.mxu0
    %v1299 = vadd.f32 %v1215, %v1237
    %v1300 = vadd.f32 %v1216, %v1257
    %v1301 = vadd.f32 %v1217, %v1277
    %v1302 = vadd.f32 %v1218, %v1297
    %v1303 = vxor.u32 %v1299, 2147483648
    %v1304 = vmul.f32 %v1303, 1.442695
    %v1305 = vpow.pop %v1304
    %v1306 = vadd.f32 %v1305, 1.0
    %v1307 = vrcp.pop %v1306
    %v1308 = vmul.f32 %v1306, %v1307
    %v1309 = vsub.f32 1.0, %v1308
    %v1310 = vmul.f32 %v1307, %v1309
    %v1311 = vadd.f32 %v1307, %v1310
    %vm1312 = vweird.f32 %v1306
    %vm1313 = vweird.f32 %v1307
    %vm1314 = vmor %vm1312, %vm1313
    %v1315 = vsel %vm1314, %v1307, %v1311
    %v1316 = vand.u32 2147483647, %v1306
    %vm1317 = vcmp.eq.f32.partialorder %v1316, 8.507059e+37
    %v1318 = vand.u32 %v1306, 2147483648
    %v1319 = vor.u32 1.1754944e-38, %v1318
    %v1320 = vsel %vm1317, %v1319, %v1315
    %v1321 = vmul.f32 1.0, %v1320
    %v1322 = vxor.u32 %v1300, 2147483648
    %v1323 = vmul.f32 %v1322, 1.442695
    %v1324 = vpow.pop %v1323
    %v1325 = vadd.f32 %v1324, 1.0
    %v1326 = vrcp.pop %v1325
    %v1327 = vmul.f32 %v1325, %v1326
    %v1328 = vsub.f32 1.0, %v1327
    %v1329 = vmul.f32 %v1326, %v1328
    %v1330 = vadd.f32 %v1326, %v1329
    %vm1331 = vweird.f32 %v1325
    %vm1332 = vweird.f32 %v1326
    %vm1333 = vmor %vm1331, %vm1332
    %v1334 = vsel %vm1333, %v1326, %v1330
    %v1335 = vand.u32 2147483647, %v1325
    %vm1336 = vcmp.eq.f32.partialorder %v1335, 8.507059e+37
    %v1337 = vand.u32 %v1325, 2147483648
    %v1338 = vor.u32 1.1754944e-38, %v1337
    %v1339 = vsel %vm1336, %v1338, %v1334
    %v1340 = vmul.f32 1.0, %v1339
    %v1341 = vtanh.pop %v1301
    %v1342 = vxor.u32 %v1302, 2147483648
    %v1343 = vmul.f32 %v1342, 1.442695
    %v1344 = vpow.pop %v1343
    %v1345 = vadd.f32 %v1344, 1.0
    %v1346 = vrcp.pop %v1345
    %v1347 = vmul.f32 %v1345, %v1346
    %v1348 = vsub.f32 1.0, %v1347
    %v1349 = vmul.f32 %v1346, %v1348
    %v1350 = vadd.f32 %v1346, %v1349
    %vm1351 = vweird.f32 %v1345
    %vm1352 = vweird.f32 %v1346
    %vm1353 = vmor %vm1351, %vm1352
    %v1354 = vsel %vm1353, %v1346, %v1350
    %v1355 = vand.u32 2147483647, %v1345
    %vm1356 = vcmp.eq.f32.partialorder %v1355, 8.507059e+37
    %v1357 = vand.u32 %v1345, 2147483648
    %v1358 = vor.u32 1.1754944e-38, %v1357
    %v1359 = vsel %vm1356, %v1358, %v1354
    %v1360 = vmul.f32 1.0, %v1359
    %v1361 = vmul.f32 %v1340, %v1209
    %v1362 = vmul.f32 %v1321, %v1341
    %v1363 = vadd.f32 %v1361, %v1362
    %v1364 = vtanh.pop %v1363
    %v1365 = vmul.f32 %v1360, %v1364
    %s1366 = smul.u32 6, 4
    %s1367 = smul.addr %s1366, 8
    %s1368 = scalar_lea.vmem [#allocation2], %s1367
    %v1369 = vld [vmem:[%s1368] sm:$0xff]
    %v1370 = vld [vmem:[%s1368 + $0x8] sm:$0xff]
    %v1371 = vld [vmem:[%s1368 + $0x10] sm:$0xff]
    %v1372 = vld [vmem:[%s1368 + $0x18] sm:$0xff]
    %1373 = vmatpush.msra.mxu0 %v445
    %1374 = vmatpush.msra.mxu0 %v441
    %1375 = vmatpush.msra.mxu0 %v437
    %1376 = vmatpush.msra.mxu0 %v433
    %1377 = vmatpush.msra.mxu0 %v429
    %1378 = vmatpush.msra.mxu0 %v425
    %1379 = vmatpush.msra.mxu0 %v421
    %1380 = vmatpush.msra.mxu0 %v417
    %1381 = vmatpush.msra.mxu0 %v413
    %1382 = vmatpush.msra.mxu0 %v409
    %1383 = vmatpush.msra.mxu0 %v405
    %1384 = vmatpush.msra.mxu0 %v401
    %1385 = vmatpush.msra.mxu0 %v397
    %1386 = vmatpush.msra.mxu0 %v393
    %1387 = vmatpush.msra.mxu0 %v389
    %1388 = vmatpush.msra.mxu0 %v385
    %1389 = vmatmul.f32.gmra.mxu0 %v1365
    %v1390 = vpop.f32.mrf.mxu0
    %v1391 = vadd.f32 0.0, %v1390
    %1392 = vdwg.mxu0
    %1393 = vmatpush.msra.mxu0 %v446
    %1394 = vmatpush.msra.mxu0 %v442
    %1395 = vmatpush.msra.mxu0 %v438
    %1396 = vmatpush.msra.mxu0 %v434
    %1397 = vmatpush.msra.mxu0 %v430
    %1398 = vmatpush.msra.mxu0 %v426
    %1399 = vmatpush.msra.mxu0 %v422
    %1400 = vmatpush.msra.mxu0 %v418
    %1401 = vmatpush.msra.mxu0 %v414
    %1402 = vmatpush.msra.mxu0 %v410
    %1403 = vmatpush.msra.mxu0 %v406
    %1404 = vmatpush.msra.mxu0 %v402
    %1405 = vmatpush.msra.mxu0 %v398
    %1406 = vmatpush.msra.mxu0 %v394
    %1407 = vmatpush.msra.mxu0 %v390
    %1408 = vmatpush.msra.mxu0 %v386
    %1409 = vmatmul.f32.gmra.mxu0 %v1365
    %v1410 = vpop.f32.mrf.mxu0
    %v1411 = vadd.f32 0.0, %v1410
    %1412 = vdwg.mxu0
    %1413 = vmatpush.msra.mxu0 %v447
    %1414 = vmatpush.msra.mxu0 %v443
    %1415 = vmatpush.msra.mxu0 %v439
    %1416 = vmatpush.msra.mxu0 %v435
    %1417 = vmatpush.msra.mxu0 %v431
    %1418 = vmatpush.msra.mxu0 %v427
    %1419 = vmatpush.msra.mxu0 %v423
    %1420 = vmatpush.msra.mxu0 %v419
    %1421 = vmatpush.msra.mxu0 %v415
    %1422 = vmatpush.msra.mxu0 %v411
    %1423 = vmatpush.msra.mxu0 %v407
    %1424 = vmatpush.msra.mxu0 %v403
    %1425 = vmatpush.msra.mxu0 %v399
    %1426 = vmatpush.msra.mxu0 %v395
    %1427 = vmatpush.msra.mxu0 %v391
    %1428 = vmatpush.msra.mxu0 %v387
    %1429 = vmatmul.f32.gmra.mxu0 %v1365
    %v1430 = vpop.f32.mrf.mxu0
    %v1431 = vadd.f32 0.0, %v1430
    %1432 = vdwg.mxu0
    %1433 = vmatpush.msra.mxu0 %v448
    %1434 = vmatpush.msra.mxu0 %v444
    %1435 = vmatpush.msra.mxu0 %v440
    %1436 = vmatpush.msra.mxu0 %v436
    %1437 = vmatpush.msra.mxu0 %v432
    %1438 = vmatpush.msra.mxu0 %v428
    %1439 = vmatpush.msra.mxu0 %v424
    %1440 = vmatpush.msra.mxu0 %v420
    %1441 = vmatpush.msra.mxu0 %v416
    %1442 = vmatpush.msra.mxu0 %v412
    %1443 = vmatpush.msra.mxu0 %v408
    %1444 = vmatpush.msra.mxu0 %v404
    %1445 = vmatpush.msra.mxu0 %v400
    %1446 = vmatpush.msra.mxu0 %v396
    %1447 = vmatpush.msra.mxu0 %v392
    %1448 = vmatpush.msra.mxu0 %v388
    %1449 = vmatmul.f32.gmra.mxu0 %v1365
    %v1450 = vpop.f32.mrf.mxu0
    %v1451 = vadd.f32 0.0, %v1450
    %1452 = vdwg.mxu0
    %v1453 = vadd.f32 %v1369, %v1391
    %v1454 = vadd.f32 %v1370, %v1411
    %v1455 = vadd.f32 %v1371, %v1431
    %v1456 = vadd.f32 %v1372, %v1451
    %v1457 = vxor.u32 %v1453, 2147483648
    %v1458 = vmul.f32 %v1457, 1.442695
    %v1459 = vpow.pop %v1458
    %v1460 = vadd.f32 %v1459, 1.0
    %v1461 = vrcp.pop %v1460
    %v1462 = vmul.f32 %v1460, %v1461
    %v1463 = vsub.f32 1.0, %v1462
    %v1464 = vmul.f32 %v1461, %v1463
    %v1465 = vadd.f32 %v1461, %v1464
    %vm1466 = vweird.f32 %v1460
    %vm1467 = vweird.f32 %v1461
    %vm1468 = vmor %vm1466, %vm1467
    %v1469 = vsel %vm1468, %v1461, %v1465
    %v1470 = vand.u32 2147483647, %v1460
    %vm1471 = vcmp.eq.f32.partialorder %v1470, 8.507059e+37
    %v1472 = vand.u32 %v1460, 2147483648
    %v1473 = vor.u32 1.1754944e-38, %v1472
    %v1474 = vsel %vm1471, %v1473, %v1469
    %v1475 = vmul.f32 1.0, %v1474
    %v1476 = vxor.u32 %v1454, 2147483648
    %v1477 = vmul.f32 %v1476, 1.442695
    %v1478 = vpow.pop %v1477
    %v1479 = vadd.f32 %v1478, 1.0
    %v1480 = vrcp.pop %v1479
    %v1481 = vmul.f32 %v1479, %v1480
    %v1482 = vsub.f32 1.0, %v1481
    %v1483 = vmul.f32 %v1480, %v1482
    %v1484 = vadd.f32 %v1480, %v1483
    %vm1485 = vweird.f32 %v1479
    %vm1486 = vweird.f32 %v1480
    %vm1487 = vmor %vm1485, %vm1486
    %v1488 = vsel %vm1487, %v1480, %v1484
    %v1489 = vand.u32 2147483647, %v1479
    %vm1490 = vcmp.eq.f32.partialorder %v1489, 8.507059e+37
    %v1491 = vand.u32 %v1479, 2147483648
    %v1492 = vor.u32 1.1754944e-38, %v1491
    %v1493 = vsel %vm1490, %v1492, %v1488
    %v1494 = vmul.f32 1.0, %v1493
    %v1495 = vtanh.pop %v1455
    %v1496 = vxor.u32 %v1456, 2147483648
    %v1497 = vmul.f32 %v1496, 1.442695
    %v1498 = vpow.pop %v1497
    %v1499 = vadd.f32 %v1498, 1.0
    %v1500 = vrcp.pop %v1499
    %v1501 = vmul.f32 %v1499, %v1500
    %v1502 = vsub.f32 1.0, %v1501
    %v1503 = vmul.f32 %v1500, %v1502
    %v1504 = vadd.f32 %v1500, %v1503
    %vm1505 = vweird.f32 %v1499
    %vm1506 = vweird.f32 %v1500
    %vm1507 = vmor %vm1505, %vm1506
    %v1508 = vsel %vm1507, %v1500, %v1504
    %v1509 = vand.u32 2147483647, %v1499
    %vm1510 = vcmp.eq.f32.partialorder %v1509, 8.507059e+37
    %v1511 = vand.u32 %v1499, 2147483648
    %v1512 = vor.u32 1.1754944e-38, %v1511
    %v1513 = vsel %vm1510, %v1512, %v1508
    %v1514 = vmul.f32 1.0, %v1513
    %v1515 = vmul.f32 %v1494, %v1363
    %v1516 = vmul.f32 %v1475, %v1495
    %v1517 = vadd.f32 %v1515, %v1516
    %v1518 = vtanh.pop %v1517
    %v1519 = vmul.f32 %v1514, %v1518
    %s1520 = smul.u32 7, 4
    %s1521 = smul.addr %s1520, 8
    %s1522 = scalar_lea.vmem [#allocation2], %s1521
    %v1523 = vld [vmem:[%s1522] sm:$0xff]
    %v1524 = vld [vmem:[%s1522 + $0x8] sm:$0xff]
    %v1525 = vld [vmem:[%s1522 + $0x10] sm:$0xff]
    %v1526 = vld [vmem:[%s1522 + $0x18] sm:$0xff]
    %1527 = vmatpush.msra.mxu0 %v445
    %1528 = vmatpush.msra.mxu0 %v441
    %1529 = vmatpush.msra.mxu0 %v437
    %1530 = vmatpush.msra.mxu0 %v433
    %1531 = vmatpush.msra.mxu0 %v429
    %1532 = vmatpush.msra.mxu0 %v425
    %1533 = vmatpush.msra.mxu0 %v421
    %1534 = vmatpush.msra.mxu0 %v417
    %1535 = vmatpush.msra.mxu0 %v413
    %1536 = vmatpush.msra.mxu0 %v409
    %1537 = vmatpush.msra.mxu0 %v405
    %1538 = vmatpush.msra.mxu0 %v401
    %1539 = vmatpush.msra.mxu0 %v397
    %1540 = vmatpush.msra.mxu0 %v393
    %1541 = vmatpush.msra.mxu0 %v389
    %1542 = vmatpush.msra.mxu0 %v385
    %1543 = vmatmul.f32.gmra.mxu0 %v1519
    %v1544 = vpop.f32.mrf.mxu0
    %v1545 = vadd.f32 0.0, %v1544
    %1546 = vdwg.mxu0
    %1547 = vmatpush.msra.mxu0 %v446
    %1548 = vmatpush.msra.mxu0 %v442
    %1549 = vmatpush.msra.mxu0 %v438
    %1550 = vmatpush.msra.mxu0 %v434
    %1551 = vmatpush.msra.mxu0 %v430
    %1552 = vmatpush.msra.mxu0 %v426
    %1553 = vmatpush.msra.mxu0 %v422
    %1554 = vmatpush.msra.mxu0 %v418
    %1555 = vmatpush.msra.mxu0 %v414
    %1556 = vmatpush.msra.mxu0 %v410
    %1557 = vmatpush.msra.mxu0 %v406
    %1558 = vmatpush.msra.mxu0 %v402
    %1559 = vmatpush.msra.mxu0 %v398
    %1560 = vmatpush.msra.mxu0 %v394
    %1561 = vmatpush.msra.mxu0 %v390
    %1562 = vmatpush.msra.mxu0 %v386
    %1563 = vmatmul.f32.gmra.mxu0 %v1519
    %v1564 = vpop.f32.mrf.mxu0
    %v1565 = vadd.f32 0.0, %v1564
    %1566 = vdwg.mxu0
    %1567 = vmatpush.msra.mxu0 %v447
    %1568 = vmatpush.msra.mxu0 %v443
    %1569 = vmatpush.msra.mxu0 %v439
    %1570 = vmatpush.msra.mxu0 %v435
    %1571 = vmatpush.msra.mxu0 %v431
    %1572 = vmatpush.msra.mxu0 %v427
    %1573 = vmatpush.msra.mxu0 %v423
    %1574 = vmatpush.msra.mxu0 %v419
    %1575 = vmatpush.msra.mxu0 %v415
    %1576 = vmatpush.msra.mxu0 %v411
    %1577 = vmatpush.msra.mxu0 %v407
    %1578 = vmatpush.msra.mxu0 %v403
    %1579 = vmatpush.msra.mxu0 %v399
    %1580 = vmatpush.msra.mxu0 %v395
    %1581 = vmatpush.msra.mxu0 %v391
    %1582 = vmatpush.msra.mxu0 %v387
    %1583 = vmatmul.f32.gmra.mxu0 %v1519
    %v1584 = vpop.f32.mrf.mxu0
    %v1585 = vadd.f32 0.0, %v1584
    %1586 = vdwg.mxu0
    %1587 = vmatpush.msra.mxu0 %v448
    %1588 = vmatpush.msra.mxu0 %v444
    %1589 = vmatpush.msra.mxu0 %v440
    %1590 = vmatpush.msra.mxu0 %v436
    %1591 = vmatpush.msra.mxu0 %v432
    %1592 = vmatpush.msra.mxu0 %v428
    %1593 = vmatpush.msra.mxu0 %v424
    %1594 = vmatpush.msra.mxu0 %v420
    %1595 = vmatpush.msra.mxu0 %v416
    %1596 = vmatpush.msra.mxu0 %v412
    %1597 = vmatpush.msra.mxu0 %v408
    %1598 = vmatpush.msra.mxu0 %v404
    %1599 = vmatpush.msra.mxu0 %v400
    %1600 = vmatpush.msra.mxu0 %v396
    %1601 = vmatpush.msra.mxu0 %v392
    %1602 = vmatpush.msra.mxu0 %v388
    %1603 = vmatmul.f32.gmra.mxu0 %v1519
    %v1604 = vpop.f32.mrf.mxu0
    %v1605 = vadd.f32 0.0, %v1604
    %1606 = vdwg.mxu0
    %v1607 = vadd.f32 %v1523, %v1545
    %v1608 = vadd.f32 %v1524, %v1565
    %v1609 = vadd.f32 %v1525, %v1585
    %v1610 = vadd.f32 %v1526, %v1605
    %v1611 = vxor.u32 %v1607, 2147483648
    %v1612 = vmul.f32 %v1611, 1.442695
    %v1613 = vpow.pop %v1612
    %v1614 = vadd.f32 %v1613, 1.0
    %v1615 = vrcp.pop %v1614
    %v1616 = vmul.f32 %v1614, %v1615
    %v1617 = vsub.f32 1.0, %v1616
    %v1618 = vmul.f32 %v1615, %v1617
    %v1619 = vadd.f32 %v1615, %v1618
    %vm1620 = vweird.f32 %v1614
    %vm1621 = vweird.f32 %v1615
    %vm1622 = vmor %vm1620, %vm1621
    %v1623 = vsel %vm1622, %v1615, %v1619
    %v1624 = vand.u32 2147483647, %v1614
    %vm1625 = vcmp.eq.f32.partialorder %v1624, 8.507059e+37
    %v1626 = vand.u32 %v1614, 2147483648
    %v1627 = vor.u32 1.1754944e-38, %v1626
    %v1628 = vsel %vm1625, %v1627, %v1623
    %v1629 = vmul.f32 1.0, %v1628
    %v1630 = vxor.u32 %v1608, 2147483648
    %v1631 = vmul.f32 %v1630, 1.442695
    %v1632 = vpow.pop %v1631
    %v1633 = vadd.f32 %v1632, 1.0
    %v1634 = vrcp.pop %v1633
    %v1635 = vmul.f32 %v1633, %v1634
    %v1636 = vsub.f32 1.0, %v1635
    %v1637 = vmul.f32 %v1634, %v1636
    %v1638 = vadd.f32 %v1634, %v1637
    %vm1639 = vweird.f32 %v1633
    %vm1640 = vweird.f32 %v1634
    %vm1641 = vmor %vm1639, %vm1640
    %v1642 = vsel %vm1641, %v1634, %v1638
    %v1643 = vand.u32 2147483647, %v1633
    %vm1644 = vcmp.eq.f32.partialorder %v1643, 8.507059e+37
    %v1645 = vand.u32 %v1633, 2147483648
    %v1646 = vor.u32 1.1754944e-38, %v1645
    %v1647 = vsel %vm1644, %v1646, %v1642
    %v1648 = vmul.f32 1.0, %v1647
    %v1649 = vtanh.pop %v1609
    %v1650 = vxor.u32 %v1610, 2147483648
    %v1651 = vmul.f32 %v1650, 1.442695
    %v1652 = vpow.pop %v1651
    %v1653 = vadd.f32 %v1652, 1.0
    %v1654 = vrcp.pop %v1653
    %v1655 = vmul.f32 %v1653, %v1654
    %v1656 = vsub.f32 1.0, %v1655
    %v1657 = vmul.f32 %v1654, %v1656
    %v1658 = vadd.f32 %v1654, %v1657
    %vm1659 = vweird.f32 %v1653
    %vm1660 = vweird.f32 %v1654
    %vm1661 = vmor %vm1659, %vm1660
    %v1662 = vsel %vm1661, %v1654, %v1658
    %v1663 = vand.u32 2147483647, %v1653
    %vm1664 = vcmp.eq.f32.partialorder %v1663, 8.507059e+37
    %v1665 = vand.u32 %v1653, 2147483648
    %v1666 = vor.u32 1.1754944e-38, %v1665
    %v1667 = vsel %vm1664, %v1666, %v1662
    %v1668 = vmul.f32 1.0, %v1667
    %v1669 = vmul.f32 %v1648, %v1517
    %v1670 = vmul.f32 %v1629, %v1649
    %v1671 = vadd.f32 %v1669, %v1670
    %v1672 = vtanh.pop %v1671
    %v1673 = vmul.f32 %v1668, %v1672
    %v1674 = vld [vmem:[#allocation11] sm:$0xff]
    %v1675 = vld [vmem:[#allocation11 + $0x8] sm:$0xff]
    %v1676 = vld [vmem:[#allocation11 + $0x10] sm:$0xff]
    %v1677 = vld [vmem:[#allocation11 + $0x18] sm:$0xff]
    %v1678 = vld [vmem:[#allocation11 + $0x20] sm:$0xff]
    %v1679 = vld [vmem:[#allocation11 + $0x28] sm:$0xff]
    %v1680 = vld [vmem:[#allocation11 + $0x30] sm:$0xff]
    %v1681 = vld [vmem:[#allocation11 + $0x38] sm:$0xff]
    %v1682 = vld [vmem:[#allocation11 + $0x40] sm:$0xff]
    %v1683 = vld [vmem:[#allocation11 + $0x48] sm:$0xff]
    %v1684 = vld [vmem:[#allocation11 + $0x50] sm:$0xff]
    %v1685 = vld [vmem:[#allocation11 + $0x58] sm:$0xff]
    %v1686 = vld [vmem:[#allocation11 + $0x60] sm:$0xff]
    %v1687 = vld [vmem:[#allocation11 + $0x68] sm:$0xff]
    %v1688 = vld [vmem:[#allocation11 + $0x70] sm:$0xff]
    %v1689 = vld [vmem:[#allocation11 + $0x78] sm:$0xff]
    %v1690 = vld [vmem:[%s5] sm:$0x1]
    %v1692 = vperm.slane %v1690, 0
    %1694 = vmatpush.msra.mxu0 %v1689
    %1695 = vmatpush.msra.mxu0 %v1688
    %1696 = vmatpush.msra.mxu0 %v1687
    %1697 = vmatpush.msra.mxu0 %v1686
    %1698 = vmatpush.msra.mxu0 %v1685
    %1699 = vmatpush.msra.mxu0 %v1684
    %1700 = vmatpush.msra.mxu0 %v1683
    %1701 = vmatpush.msra.mxu0 %v1682
    %1702 = vmatpush.msra.mxu0 %v1681
    %1703 = vmatpush.msra.mxu0 %v1680
    %1704 = vmatpush.msra.mxu0 %v1679
    %1705 = vmatpush.msra.mxu0 %v1678
    %1706 = vmatpush.msra.mxu0 %v1677
    %1707 = vmatpush.msra.mxu0 %v1676
    %1708 = vmatpush.msra.mxu0 %v1675
    %1709 = vmatpush.msra.mxu0 %v1674
    %1710 = vmatmul.f32.gmra.mxu0 %v1673
    %v1711 = vpop.f32.mrf.mxu0
    %v1712 = vadd.f32 %v1692, %v1711
    %1713 = vdwg.mxu0
    %1714 = vst [vmem:[#allocation12] sm:$0xff] %v1712
    // Predicated region
    $region46: #{tpu_custom_call.1} parent=1 // pred_check
      _
    $region47: #{tpu_custom_call.1} parent=1 // pred_check_branch
      %1716 = sbr.rel (0) target = $region49
    $region48: #{tpu_custom_call.1} parent=1 // pred_region
      %1718 = vsyncadd [#allocation5], 0
      %s1720 = sshll.u32 [#allocation12], 4
      %s1721 = int_to_ptr.vmem [resolvable:$true] %s1720
      %s1722 = sshll.u32 %s6, 4
      %s1723 = int_to_ptr.hbm [resolvable:$true] %s1722
      %1725 = dma.vmem_to_hbm [thread:$0]  %s1721, 128, %s1723, [#allocation5]
    $region49: #{tpu_custom_call.1} parent=1 // pred_fallthru
      _
    // Predicated region
    $region50: #{tpu_custom_call.1} parent=1 // pred_check
      _
    $region51: #{tpu_custom_call.1} parent=1 // pred_check_branch
      %1727 = sbr.rel (0) target = $region53
    $region52: #{tpu_custom_call.1} parent=1 // pred_region
      %1729 = dma.done [#allocation5], 128
    $region53: #{tpu_custom_call.1} parent=1 // pred_fallthru
      _
    %1730 = vsyncpa [#allocation4], 1
    %1731 = vsyncpa [#allocation7], 1
    %1732 = vsyncpa [#allocation10], 1
    %1733 = vsyncpa [#allocation5], 1

</llo_original>
